<compile_context>
chip_gen: v7x
topology: tpu7x:2x2x1
jax: 0.10.0
libtpu: 0.0.40
codegen_flags: <defaults>
</compile_context>

<pallas_src>
import functools

import numpy as np

import jax
import jax.numpy as jnp
from jax.experimental import pallas as pl
from jax.experimental.pallas import tpu as pltpu


def _abs_atan2(y, x):
    """|atan2(y, x)| via a Cephes-style atanf polynomial.

    Divides are replaced with EUP approximate reciprocals (free slot on TPU);
    accuracy stays well inside the 1e-3 test tolerance.
    """
    f32 = jnp.float32
    a = jnp.abs(y)
    ax = jnp.abs(x)
    denom = jnp.where(ax > 0.0, ax, f32(1.0))
    q = a * pl.reciprocal(denom, approx=True)       # tan(reference angle) >= 0

    t_pi8 = f32(0.41421356237309503)                # tan(pi/8)
    t_3pi8 = f32(2.414213562373095)                 # tan(3pi/8)
    big = q > t_3pi8
    mid = q > t_pi8

    q_big = -pl.reciprocal(jnp.where(big, q, f32(1.0)), approx=True)
    q_mid = (q - 1.0) * pl.reciprocal(q + 1.0, approx=True)
    z = jnp.where(big, q_big, jnp.where(mid, q_mid, q))
    y0 = jnp.where(big, f32(np.pi / 2), jnp.where(mid, f32(np.pi / 4), f32(0.0)))

    zz = z * z
    poly = ((f32(8.05374449538e-2) * zz - f32(1.38776856032e-1)) * zz
            + f32(1.99777106478e-1)) * zz - f32(3.33329491539e-1)
    r = y0 + z + z * zz * poly                      # atan(q) in [0, pi/2]

    # Quadrant / degenerate handling (abs already applied via |y|).
    return jnp.where(x > 0.0, r,
           jnp.where(x < 0.0, f32(np.pi) - r,
           jnp.where(a > 0.0, f32(np.pi / 2), f32(0.0))))


def _fourier_loss_kernel(p_ref, t_ref, ch_ref, sh_ref, cwb_ref, swb_ref,
                         csb_ref, cmask_ref, wband_ref, seg_ref, out_ref,
                         *, inv_hw):
    f32 = jnp.float32
    ch = ch_ref[...]                                # (H, H) cos
    sh = sh_ref[...]                                # (H, H) -sin
    cwb = cwb_ref[...]                              # (TPW, TPW) block-diag cos
    swb = swb_ref[...]                              # (TPW, TPW) block-diag -sin
    csb = csb_ref[...]                              # (TPW, TPW) cwb + swb
    cmask = cmask_ref[...]                          # (H, TPW) rfft2-region mask
    wband = wband_ref[...]                          # (H, TPW) band weight map
    seg = seg_ref[...]                              # (TPW, 128) plane-segment mat

    def fft2(x):
        # rows: Y = F_H @ x ; cols: X = Y @ F_W  (3-matmul complex multiply)
        yr = jnp.dot(ch, x, preferred_element_type=f32)
        yi = jnp.dot(sh, x, preferred_element_type=f32)
        t1 = jnp.dot(yr, cwb, preferred_element_type=f32)
        t2 = jnp.dot(yi, swb, preferred_element_type=f32)
        t3 = jnp.dot(yr + yi, csb, preferred_element_type=f32)
        return t1 - t2, t3 - t1 - t2

    ar, ai = fft2(p_ref[0].astype(f32))             # (H, TPW)
    br, bi = fft2(t_ref[0].astype(f32))

    pow_p = ar * ar + ai * ai                       # reused for mag + spectral
    pow_t = br * br + bi * bi
    mag_p = jnp.sqrt(pow_p)
    mag_t = jnp.sqrt(pow_t)
    dmag = jnp.abs(mag_p - mag_t)

    s_mag = jnp.sum(cmask * dmag)                   # L1 of |rfft2| magnitudes
    s_band = jnp.sum(wband * dmag)                  # weighted band L1 (full fft2)

    # wrapped phase diff = angle(p * conj(t)) = atan2(ai*br-ar*bi, ar*br+ai*bi)
    s_x = ai * br - ar * bi
    c_x = ar * br + ai * bi
    s_phase = jnp.sum(cmask * _abs_atan2(s_x, c_x))

    # spectral: per-plane |mean power difference| via a plane-segment matmul
    per_plane = jnp.dot(pow_p - pow_t, seg, preferred_element_type=f32)  # (H,128)
    plane_sums = jnp.sum(per_plane, axis=0, keepdims=True)               # (1,128)
    s_spec = jnp.sum(jnp.abs(plane_sums)) * f32(inv_hw)

    # Write the 4 partial sums into a lane-aligned (8,128) tile: row 0, lanes 0..3.
    sub = jax.lax.broadcasted_iota(jnp.int32, (8, 128), 0)
    lane = jax.lax.broadcasted_iota(jnp.int32, (8, 128), 1)
    row0 = sub == 0
    tile = jnp.where(row0 & (lane == 0), s_mag,
           jnp.where(row0 & (lane == 1), s_phase,
           jnp.where(row0 & (lane == 2), s_band,
           jnp.where(row0 & (lane == 3), s_spec, f32(0.0)))))
    out_ref[0] = tile


def fourier_aware_loss(pred, target, *, loss_weight=1.0, phase_weight=0.1,
                       high_freq_weight=2.0, low_freq_weight=1.0):
    """JAX/Pallas equivalent of FourierAwareLoss.forward (NCHW inputs)."""
    assert pred.shape == target.shape and pred.ndim == 4
    B, C, H, W = pred.shape
    n_planes = B * C
    w_r = W // 2 + 1

    # --- lane packing: TP planes side by side so TP*W >= 128 when W < 128 ---
    tp = 1 if W >= 128 else -(-128 // W)
    tpw = tp * W
    n_pad = (-n_planes) % tp
    num_blocks = (n_planes + n_pad) // tp

    # Pass native dtype through the DMA; cast to f32 inside the kernel.
    p = pred.reshape(n_planes, H, W)
    t = target.reshape(n_planes, H, W)
    if n_pad:
        zpad = jnp.zeros((n_pad, H, W), pred.dtype)  # zero planes contribute 0
        p = jnp.concatenate([p, zpad], axis=0)
        t = jnp.concatenate([t, zpad], axis=0)
    p = p.reshape(num_blocks, tp, H, W).transpose(0, 2, 1, 3).reshape(num_blocks, H, tpw)
    t = t.reshape(num_blocks, tp, H, W).transpose(0, 2, 1, 3).reshape(num_blocks, H, tpw)

    # --- DFT matrices (float64 on host for accuracy, stored f32) ---
    kh = np.arange(H)
    ah = 2.0 * np.pi * np.outer(kh, kh) / H
    kw = np.arange(W)
    aw = 2.0 * np.pi * np.outer(kw, kw) / W
    ch = np.cos(ah)
    sh = -np.sin(ah)
    cw = np.cos(aw)
    sw = -np.sin(aw)
    eye = np.eye(tp)
    cwb = np.kron(eye, cw)                   # block-diagonal column DFT (cos)
    swb = np.kron(eye, sw)                   # block-diagonal column DFT (-sin)
    csb = cwb + swb                          # Karatsuba helper (Cw + Sw)

    # --- band-weight map: torch masks live in fftshift-ed coords -> ifftshift ---
    fh = (np.arange(H) - H // 2).astype(np.float64)[:, None]
    fw = (np.arange(W) - W // 2).astype(np.float64)[None, :]
    fmag = np.sqrt(fh * fh + fw * fw)
    max_freq = min(H, W) // 2
    low_m = (fmag <= max_freq * 0.3).astype(np.float64)
    high_m = (fmag > max_freq * 0.3).astype(np.float64)
    wband = np.fft.ifftshift(low_freq_weight * low_m + high_freq_weight * high_m)
    wband_packed = np.tile(wband, (1, tp))                       # (H, TPW)

    # rfft2-region lane mask: within each packed plane keep cols < W//2+1.
    cmask_row = np.tile((np.arange(W) < w_r).astype(np.float64), tp)[None, :]
    cmask_packed = np.broadcast_to(cmask_row, (H, tpw)).copy()   # (H, TPW)

    # Plane segment matrix for the per-plane spectral reduce (lane -> plane id).
    seg = np.zeros((tpw, 128))
    seg[np.arange(tpw), np.arange(tpw) // W] = 1.0

    f32 = jnp.float32
    as32 = lambda a: jnp.asarray(a, dtype=f32)

    kernel = functools.partial(_fourier_loss_kernel, inv_hw=1.0 / (H * W))

    # Rough VMEM footprint -> explicit limit with headroom (v5e 16 MiB scoped
    # default, v7x 64 MiB physical).
    itemsize = np.dtype(pred.dtype).itemsize
    footprint = (2 * 2 * H * tpw * itemsize                       # inputs x2 bufs
                 + 2 * 4 * (2 * H * H + 3 * tpw * tpw + 2 * H * tpw + tpw * 128)
                 + 16 * H * tpw * 4                               # live f32 temps
                 + 2 * 8 * 128 * 4)
    vmem_limit = int(min(max(2 * footprint, 32 * 1024 * 1024), 64 * 1024 * 1024))

    partials = pl.pallas_call(
        kernel,
        out_shape=jax.ShapeDtypeStruct((num_blocks, 8, 128), jnp.float32),
        grid_spec=pltpu.PrefetchScalarGridSpec(
            num_scalar_prefetch=0,
            grid=(num_blocks,),
            in_specs=[
                pl.BlockSpec((1, H, tpw), lambda i: (i, 0, 0)),
                pl.BlockSpec((1, H, tpw), lambda i: (i, 0, 0)),
                pl.BlockSpec((H, H), lambda i: (0, 0)),
                pl.BlockSpec((H, H), lambda i: (0, 0)),
                pl.BlockSpec((tpw, tpw), lambda i: (0, 0)),
                pl.BlockSpec((tpw, tpw), lambda i: (0, 0)),
                pl.BlockSpec((tpw, tpw), lambda i: (0, 0)),
                pl.BlockSpec((H, tpw), lambda i: (0, 0)),
                pl.BlockSpec((H, tpw), lambda i: (0, 0)),
                pl.BlockSpec((tpw, 128), lambda i: (0, 0)),
            ],
            out_specs=pl.BlockSpec((1, 8, 128), lambda i: (i, 0, 0)),
        ),
        compiler_params=pltpu.CompilerParams(
            dimension_semantics=("parallel",),
            vmem_limit_bytes=vmem_limit,
        ),
    )(p, t, as32(ch), as32(sh), as32(cwb), as32(swb), as32(csb),
      as32(cmask_packed), as32(wband_packed), as32(seg))

    sums = jnp.sum(partials[:, 0, :4], axis=0)
    s_mag, s_phase, s_band, s_spec = sums[0], sums[1], sums[2], sums[3]

    n = jnp.float32(n_planes)
    mag_loss = s_mag / (n * H * w_r)
    phase_loss = s_phase / (n * H * w_r)
    band_loss = s_band / (n * H * W)
    spec_loss = s_spec / n

    total = mag_loss + phase_weight * phase_loss + band_loss + 0.1 * spec_loss
    return total * jnp.float32(loss_weight)


def _reference(pred, target, *, loss_weight=1.0, phase_weight=0.1,
               high_freq_weight=2.0, low_freq_weight=1.0):
    """Pure-JAX reference mirroring FourierAwareLoss.forward."""
    pred = pred.astype(jnp.float32)
    target = target.astype(jnp.float32)
    B, C, H, W = pred.shape

    # magnitude loss (rfft2)
    pf = jnp.fft.rfft2(pred, axes=(-2, -1))
    tf = jnp.fft.rfft2(target, axes=(-2, -1))
    mag_loss = jnp.mean(jnp.abs(jnp.abs(pf) - jnp.abs(tf)))

    # phase loss (rfft2)
    d = jnp.angle(pf) - jnp.angle(tf)
    d = jnp.arctan2(jnp.sin(d), jnp.cos(d))
    ph_loss = jnp.mean(jnp.abs(d))

    # frequency band loss (full fft2, shifted, masked)
    pff = jnp.fft.fft2(pred, axes=(-2, -1))
    tff = jnp.fft.fft2(target, axes=(-2, -1))
    pfs = jnp.fft.fftshift(pff, axes=(-2, -1))
    tfs = jnp.fft.fftshift(tff, axes=(-2, -1))
    fh = (jnp.arange(H) - H // 2).astype(jnp.float32)[:, None]
    fw = (jnp.arange(W) - W // 2).astype(jnp.float32)[None, :]
    fmag = jnp.sqrt(fh ** 2 + fw ** 2)
    max_freq = min(H, W) // 2
    low_mask = (fmag <= max_freq * 0.3).astype(jnp.float32)
    high_mask = (fmag > max_freq * 0.3).astype(jnp.float32)
    low_loss = jnp.mean(jnp.abs(jnp.abs(pfs * low_mask) - jnp.abs(tfs * low_mask)))
    high_loss = jnp.mean(jnp.abs(jnp.abs(pfs * high_mask) - jnp.abs(tfs * high_mask)))
    band_loss = low_freq_weight * low_loss + high_freq_weight * high_loss

    # spectral loss
    p_pow = jnp.mean(jnp.abs(pff) ** 2, axis=(2, 3))
    t_pow = jnp.mean(jnp.abs(tff) ** 2, axis=(2, 3))
    spec_loss = jnp.mean(jnp.abs(p_pow - t_pow))

    total = mag_loss + phase_weight * ph_loss + band_loss + 0.1 * spec_loss
    return total * loss_weight


if __name__ == "__main__":
    key = jax.random.PRNGKey(0)
    k1, k2 = jax.random.split(key)
    B, C, H, W = 2, 4, 16, 16
    pred = jax.random.normal(k1, (B, C, H, W), dtype=jnp.float32)
    target = jax.random.normal(k2, (B, C, H, W), dtype=jnp.float32)

    loss = fourier_aware_loss(pred, target, loss_weight=1.0, phase_weight=0.1,
                              high_freq_weight=2.0, low_freq_weight=1.0)
    loss = jax.block_until_ready(loss)

    ref = _reference(pred, target, loss_weight=1.0, phase_weight=0.1,
                     high_freq_weight=2.0, low_freq_weight=1.0)
    assert jnp.allclose(loss, ref, rtol=1e-3, atol=1e-3), (loss, ref)

    print("KERNEL_OK")
</pallas_src>

<mosaic_0001>
module attributes {stable_mosaic.version = 11 : i64} {
  func.func @_fourier_loss_kernel(%arg0: i32, %arg1: memref<1x16x128xf32, #tpu.memory_space<vmem>>, %arg2: memref<1x16x128xf32, #tpu.memory_space<vmem>>, %arg3: memref<16x16xf32, #tpu.memory_space<vmem>>, %arg4: memref<16x16xf32, #tpu.memory_space<vmem>>, %arg5: memref<128x128xf32, #tpu.memory_space<vmem>>, %arg6: memref<128x128xf32, #tpu.memory_space<vmem>>, %arg7: memref<128x128xf32, #tpu.memory_space<vmem>>, %arg8: memref<16x128xf32, #tpu.memory_space<vmem>>, %arg9: memref<16x128xf32, #tpu.memory_space<vmem>>, %arg10: memref<128x128xf32, #tpu.memory_space<vmem>>, %arg11: memref<1x8x128xf32, #tpu.memory_space<vmem>>) attributes {dimension_semantics = [#tpu.dimension_semantics<parallel>], iteration_bounds = array<i64: 1>, scalar_prefetch = 0 : i64, scratch_operands = 0 : i64, tpu.core_type = #tpu.core_type<tc>, window_params = [{transform_indices = @transform_0, window_bounds = array<i64: 1, 16, 128>}, {transform_indices = @transform_1, window_bounds = array<i64: 1, 16, 128>}, {pipeline_mode = #tpu.pipeline_mode<synchronous>, transform_indices = @transform_2, window_bounds = array<i64: 16, 16>}, {pipeline_mode = #tpu.pipeline_mode<synchronous>, transform_indices = @transform_3, window_bounds = array<i64: 16, 16>}, {pipeline_mode = #tpu.pipeline_mode<synchronous>, transform_indices = @transform_4, window_bounds = array<i64: 128, 128>}, {pipeline_mode = #tpu.pipeline_mode<synchronous>, transform_indices = @transform_5, window_bounds = array<i64: 128, 128>}, {pipeline_mode = #tpu.pipeline_mode<synchronous>, transform_indices = @transform_6, window_bounds = array<i64: 128, 128>}, {pipeline_mode = #tpu.pipeline_mode<synchronous>, transform_indices = @transform_7, window_bounds = array<i64: 16, 128>}, {pipeline_mode = #tpu.pipeline_mode<synchronous>, transform_indices = @transform_8, window_bounds = array<i64: 16, 128>}, {pipeline_mode = #tpu.pipeline_mode<synchronous>, transform_indices = @transform_9, window_bounds = array<i64: 128, 128>}, {transform_indices = @transform_10, window_bounds = array<i64: 1, 8, 128>}]} {
    %c0 = arith.constant 0 : index
    %c0_0 = arith.constant 0 : index
    %0 = vector.load %arg3[%c0, %c0_0] : memref<16x16xf32, #tpu.memory_space<vmem>>, vector<16x16xf32>
    %c0_1 = arith.constant 0 : index
    %c0_2 = arith.constant 0 : index
    %1 = vector.load %arg4[%c0_1, %c0_2] : memref<16x16xf32, #tpu.memory_space<vmem>>, vector<16x16xf32>
    %c0_3 = arith.constant 0 : index
    %c0_4 = arith.constant 0 : index
    %2 = vector.load %arg5[%c0_3, %c0_4] : memref<128x128xf32, #tpu.memory_space<vmem>>, vector<128x128xf32>
    %c0_5 = arith.constant 0 : index
    %c0_6 = arith.constant 0 : index
    %3 = vector.load %arg6[%c0_5, %c0_6] : memref<128x128xf32, #tpu.memory_space<vmem>>, vector<128x128xf32>
    %c0_7 = arith.constant 0 : index
    %c0_8 = arith.constant 0 : index
    %4 = vector.load %arg7[%c0_7, %c0_8] : memref<128x128xf32, #tpu.memory_space<vmem>>, vector<128x128xf32>
    %c0_9 = arith.constant 0 : index
    %c0_10 = arith.constant 0 : index
    %5 = vector.load %arg8[%c0_9, %c0_10] : memref<16x128xf32, #tpu.memory_space<vmem>>, vector<16x128xf32>
    %c0_11 = arith.constant 0 : index
    %c0_12 = arith.constant 0 : index
    %6 = vector.load %arg9[%c0_11, %c0_12] : memref<16x128xf32, #tpu.memory_space<vmem>>, vector<16x128xf32>
    %c0_13 = arith.constant 0 : index
    %c0_14 = arith.constant 0 : index
    %7 = vector.load %arg10[%c0_13, %c0_14] : memref<128x128xf32, #tpu.memory_space<vmem>>, vector<128x128xf32>
    %c0_15 = arith.constant 0 : index
    %c0_16 = arith.constant 0 : index
    %c0_17 = arith.constant 0 : index
    %8 = vector.load %arg1[%c0_15, %c0_16, %c0_17] : memref<1x16x128xf32, #tpu.memory_space<vmem>>, vector<1x16x128xf32>
    %9 = vector.shape_cast %8 : vector<1x16x128xf32> to vector<16x128xf32>
    %cst = arith.constant dense<0.000000e+00> : vector<16x128xf32>
    %10 = tpu.matmul %0, %9, %cst {dimension_numbers = #tpu.dot_dimension_numbers<[1], [0], [0], [1], [0, 0, 1, 1], [], []>} : vector<16x16xf32>, vector<16x128xf32>, vector<16x128xf32> -> vector<16x128xf32>
    %cst_18 = arith.constant dense<0.000000e+00> : vector<16x128xf32>
    %11 = tpu.matmul %1, %9, %cst_18 {dimension_numbers = #tpu.dot_dimension_numbers<[1], [0], [0], [1], [0, 0, 1, 1], [], []>} : vector<16x16xf32>, vector<16x128xf32>, vector<16x128xf32> -> vector<16x128xf32>
    %cst_19 = arith.constant dense<0.000000e+00> : vector<16x128xf32>
    %12 = tpu.matmul %10, %2, %cst_19 {dimension_numbers = #tpu.dot_dimension_numbers<[1], [0], [0], [1], [0, 0, 1, 1], [], []>} : vector<16x128xf32>, vector<128x128xf32>, vector<16x128xf32> -> vector<16x128xf32>
    %cst_20 = arith.constant dense<0.000000e+00> : vector<16x128xf32>
    %13 = tpu.matmul %11, %3, %cst_20 {dimension_numbers = #tpu.dot_dimension_numbers<[1], [0], [0], [1], [0, 0, 1, 1], [], []>} : vector<16x128xf32>, vector<128x128xf32>, vector<16x128xf32> -> vector<16x128xf32>
    %14 = arith.addf %10, %11 : vector<16x128xf32>
    %cst_21 = arith.constant dense<0.000000e+00> : vector<16x128xf32>
    %15 = tpu.matmul %14, %4, %cst_21 {dimension_numbers = #tpu.dot_dimension_numbers<[1], [0], [0], [1], [0, 0, 1, 1], [], []>} : vector<16x128xf32>, vector<128x128xf32>, vector<16x128xf32> -> vector<16x128xf32>
    %16 = arith.subf %12, %13 : vector<16x128xf32>
    %17 = arith.subf %15, %12 : vector<16x128xf32>
    %18 = arith.subf %17, %13 : vector<16x128xf32>
    %c0_22 = arith.constant 0 : index
    %c0_23 = arith.constant 0 : index
    %c0_24 = arith.constant 0 : index
    %19 = vector.load %arg2[%c0_22, %c0_23, %c0_24] : memref<1x16x128xf32, #tpu.memory_space<vmem>>, vector<1x16x128xf32>
    %20 = vector.shape_cast %19 : vector<1x16x128xf32> to vector<16x128xf32>
    %cst_25 = arith.constant dense<0.000000e+00> : vector<16x128xf32>
    %21 = tpu.matmul %0, %20, %cst_25 {dimension_numbers = #tpu.dot_dimension_numbers<[1], [0], [0], [1], [0, 0, 1, 1], [], []>} : vector<16x16xf32>, vector<16x128xf32>, vector<16x128xf32> -> vector<16x128xf32>
    %cst_26 = arith.constant dense<0.000000e+00> : vector<16x128xf32>
    %22 = tpu.matmul %1, %20, %cst_26 {dimension_numbers = #tpu.dot_dimension_numbers<[1], [0], [0], [1], [0, 0, 1, 1], [], []>} : vector<16x16xf32>, vector<16x128xf32>, vector<16x128xf32> -> vector<16x128xf32>
    %cst_27 = arith.constant dense<0.000000e+00> : vector<16x128xf32>
    %23 = tpu.matmul %21, %2, %cst_27 {dimension_numbers = #tpu.dot_dimension_numbers<[1], [0], [0], [1], [0, 0, 1, 1], [], []>} : vector<16x128xf32>, vector<128x128xf32>, vector<16x128xf32> -> vector<16x128xf32>
    %cst_28 = arith.constant dense<0.000000e+00> : vector<16x128xf32>
    %24 = tpu.matmul %22, %3, %cst_28 {dimension_numbers = #tpu.dot_dimension_numbers<[1], [0], [0], [1], [0, 0, 1, 1], [], []>} : vector<16x128xf32>, vector<128x128xf32>, vector<16x128xf32> -> vector<16x128xf32>
    %25 = arith.addf %21, %22 : vector<16x128xf32>
    %cst_29 = arith.constant dense<0.000000e+00> : vector<16x128xf32>
    %26 = tpu.matmul %25, %4, %cst_29 {dimension_numbers = #tpu.dot_dimension_numbers<[1], [0], [0], [1], [0, 0, 1, 1], [], []>} : vector<16x128xf32>, vector<128x128xf32>, vector<16x128xf32> -> vector<16x128xf32>
    %27 = arith.subf %23, %24 : vector<16x128xf32>
    %28 = arith.subf %26, %23 : vector<16x128xf32>
    %29 = arith.subf %28, %24 : vector<16x128xf32>
    %30 = arith.mulf %16, %16 : vector<16x128xf32>
    %31 = arith.mulf %18, %18 : vector<16x128xf32>
    %32 = arith.addf %30, %31 : vector<16x128xf32>
    %33 = arith.mulf %27, %27 : vector<16x128xf32>
    %34 = arith.mulf %29, %29 : vector<16x128xf32>
    %35 = arith.addf %33, %34 : vector<16x128xf32>
    %36 = math.sqrt %32 : vector<16x128xf32>
    %37 = math.sqrt %35 : vector<16x128xf32>
    %38 = arith.subf %36, %37 : vector<16x128xf32>
    %39 = math.absf %38 : vector<16x128xf32>
    %40 = arith.mulf %5, %39 : vector<16x128xf32>
    %41 = vector.shape_cast %40 : vector<16x128xf32> to vector<1x16x128xf32>
    %cst_30 = arith.constant dense<0.000000e+00> : vector<1xf32>
    %42 = vector.multi_reduction <add>, %41, %cst_30 [1, 2] : vector<1x16x128xf32> to vector<1xf32>
    %43 = vector.shape_cast %42 : vector<1xf32> to vector<1x1x1xf32>
    %44 = vector.extract %43[0, 0, 0] : f32 from vector<1x1x1xf32>
    %45 = arith.mulf %6, %39 : vector<16x128xf32>
    %46 = vector.shape_cast %45 : vector<16x128xf32> to vector<1x16x128xf32>
    %cst_31 = arith.constant dense<0.000000e+00> : vector<1xf32>
    %47 = vector.multi_reduction <add>, %46, %cst_31 [1, 2] : vector<1x16x128xf32> to vector<1xf32>
    %48 = vector.shape_cast %47 : vector<1xf32> to vector<1x1x1xf32>
    %49 = vector.extract %48[0, 0, 0] : f32 from vector<1x1x1xf32>
    %50 = arith.mulf %18, %27 : vector<16x128xf32>
    %51 = arith.mulf %16, %29 : vector<16x128xf32>
    %52 = arith.subf %50, %51 : vector<16x128xf32>
    %53 = arith.mulf %16, %27 : vector<16x128xf32>
    %54 = arith.mulf %18, %29 : vector<16x128xf32>
    %55 = arith.addf %53, %54 : vector<16x128xf32>
    %56 = math.absf %52 : vector<16x128xf32>
    %57 = math.absf %55 : vector<16x128xf32>
    %cst_32 = arith.constant 0.000000e+00 : f32
    %58 = vector.broadcast %cst_32 : f32 to vector<16x128xf32>
    %59 = arith.cmpf ogt, %57, %58 : vector<16x128xf32>
    %cst_33 = arith.constant 1.000000e+00 : f32
    %60 = vector.broadcast %cst_33 : f32 to vector<16x128xf32>
    %61 = arith.select %59, %57, %60 : vector<16x128xi1>, vector<16x128xf32>
    %62 = tpu.reciprocal %61 {approx = true} : vector<16x128xf32> -> vector<16x128xf32>
    %63 = arith.mulf %56, %62 : vector<16x128xf32>
    %cst_34 = arith.constant 2.41421366 : f32
    %64 = vector.broadcast %cst_34 : f32 to vector<16x128xf32>
    %65 = arith.cmpf ogt, %63, %64 : vector<16x128xf32>
    %cst_35 = arith.constant 0.414213568 : f32
    %66 = vector.broadcast %cst_35 : f32 to vector<16x128xf32>
    %67 = arith.cmpf ogt, %63, %66 : vector<16x128xf32>
    %cst_36 = arith.constant 1.000000e+00 : f32
    %68 = vector.broadcast %cst_36 : f32 to vector<16x128xf32>
    %69 = arith.select %65, %63, %68 : vector<16x128xi1>, vector<16x128xf32>
    %70 = tpu.reciprocal %69 {approx = true} : vector<16x128xf32> -> vector<16x128xf32>
    %cst_37 = arith.constant 0.000000e+00 : f32
    %71 = vector.broadcast %cst_37 : f32 to vector<16x128xf32>
    %72 = arith.subf %71, %70 : vector<16x128xf32>
    %cst_38 = arith.constant 1.000000e+00 : f32
    %73 = vector.broadcast %cst_38 : f32 to vector<16x128xf32>
    %74 = arith.subf %63, %73 : vector<16x128xf32>
    %cst_39 = arith.constant 1.000000e+00 : f32
    %75 = vector.broadcast %cst_39 : f32 to vector<16x128xf32>
    %76 = arith.addf %63, %75 : vector<16x128xf32>
    %77 = tpu.reciprocal %76 {approx = true} : vector<16x128xf32> -> vector<16x128xf32>
    %78 = arith.mulf %74, %77 : vector<16x128xf32>
    %79 = arith.select %67, %78, %63 : vector<16x128xi1>, vector<16x128xf32>
    %80 = arith.select %65, %72, %79 : vector<16x128xi1>, vector<16x128xf32>
    %cst_40 = arith.constant 0.785398185 : f32
    %cst_41 = arith.constant 0.000000e+00 : f32
    %81 = vector.broadcast %cst_40 : f32 to vector<16x128xf32>
    %82 = vector.broadcast %cst_41 : f32 to vector<16x128xf32>
    %83 = arith.select %67, %81, %82 : vector<16x128xi1>, vector<16x128xf32>
    %cst_42 = arith.constant 1.57079637 : f32
    %84 = vector.broadcast %cst_42 : f32 to vector<16x128xf32>
    %85 = arith.select %65, %84, %83 : vector<16x128xi1>, vector<16x128xf32>
    %86 = arith.mulf %80, %80 : vector<16x128xf32>
    %cst_43 = arith.constant 0.0805374458 : f32
    %87 = vector.broadcast %cst_43 : f32 to vector<16x128xf32>
    %88 = arith.mulf %87, %86 : vector<16x128xf32>
    %cst_44 = arith.constant 0.138776854 : f32
    %89 = vector.broadcast %cst_44 : f32 to vector<16x128xf32>
    %90 = arith.subf %88, %89 : vector<16x128xf32>
    %91 = arith.mulf %90, %86 : vector<16x128xf32>
    %cst_45 = arith.constant 0.199777111 : f32
    %92 = vector.broadcast %cst_45 : f32 to vector<16x128xf32>
    %93 = arith.addf %91, %92 : vector<16x128xf32>
    %94 = arith.mulf %93, %86 : vector<16x128xf32>
    %cst_46 = arith.constant 0.333329499 : f32
    %95 = vector.broadcast %cst_46 : f32 to vector<16x128xf32>
    %96 = arith.subf %94, %95 : vector<16x128xf32>
    %97 = arith.addf %85, %80 : vector<16x128xf32>
    %98 = arith.mulf %80, %86 : vector<16x128xf32>
    %99 = arith.mulf %98, %96 : vector<16x128xf32>
    %100 = arith.addf %97, %99 : vector<16x128xf32>
    %cst_47 = arith.constant 0.000000e+00 : f32
    %101 = vector.broadcast %cst_47 : f32 to vector<16x128xf32>
    %102 = arith.cmpf ogt, %55, %101 : vector<16x128xf32>
    %cst_48 = arith.constant 0.000000e+00 : f32
    %103 = vector.broadcast %cst_48 : f32 to vector<16x128xf32>
    %104 = arith.cmpf olt, %55, %103 : vector<16x128xf32>
    %cst_49 = arith.constant 3.14159274 : f32
    %105 = vector.broadcast %cst_49 : f32 to vector<16x128xf32>
    %106 = arith.subf %105, %100 : vector<16x128xf32>
    %cst_50 = arith.constant 0.000000e+00 : f32
    %107 = vector.broadcast %cst_50 : f32 to vector<16x128xf32>
    %108 = arith.cmpf ogt, %56, %107 : vector<16x128xf32>
    %cst_51 = arith.constant 1.57079637 : f32
    %cst_52 = arith.constant 0.000000e+00 : f32
    %109 = vector.broadcast %cst_51 : f32 to vector<16x128xf32>
    %110 = vector.broadcast %cst_52 : f32 to vector<16x128xf32>
    %111 = arith.select %108, %109, %110 : vector<16x128xi1>, vector<16x128xf32>
    %112 = arith.select %104, %106, %111 : vector<16x128xi1>, vector<16x128xf32>
    %113 = arith.select %102, %100, %112 : vector<16x128xi1>, vector<16x128xf32>
    %114 = arith.mulf %5, %113 : vector<16x128xf32>
    %115 = vector.shape_cast %114 : vector<16x128xf32> to vector<1x16x128xf32>
    %cst_53 = arith.constant dense<0.000000e+00> : vector<1xf32>
    %116 = vector.multi_reduction <add>, %115, %cst_53 [1, 2] : vector<1x16x128xf32> to vector<1xf32>
    %117 = vector.shape_cast %116 : vector<1xf32> to vector<1x1x1xf32>
    %118 = vector.extract %117[0, 0, 0] : f32 from vector<1x1x1xf32>
    %119 = arith.subf %32, %35 : vector<16x128xf32>
    %cst_54 = arith.constant dense<0.000000e+00> : vector<16x128xf32>
    %120 = tpu.matmul %119, %7, %cst_54 {dimension_numbers = #tpu.dot_dimension_numbers<[1], [0], [0], [1], [0, 0, 1, 1], [], []>} : vector<16x128xf32>, vector<128x128xf32>, vector<16x128xf32> -> vector<16x128xf32>
    %cst_55 = arith.constant dense<0.000000e+00> : vector<128xf32>
    %121 = vector.multi_reduction <add>, %120, %cst_55 [0] : vector<16x128xf32> to vector<128xf32>
    %122 = vector.shape_cast %121 : vector<128xf32> to vector<1x128xf32>
    %123 = math.absf %122 : vector<1x128xf32>
    %124 = vector.shape_cast %123 : vector<1x128xf32> to vector<1x1x128xf32>
    %cst_56 = arith.constant dense<0.000000e+00> : vector<1xf32>
    %125 = vector.multi_reduction <add>, %124, %cst_56 [1, 2] : vector<1x1x128xf32> to vector<1xf32>
    %126 = vector.shape_cast %125 : vector<1xf32> to vector<1x1x1xf32>
    %127 = vector.extract %126[0, 0, 0] : f32 from vector<1x1x1xf32>
    %cst_57 = arith.constant 3.906250e-03 : f32
    %128 = arith.mulf %127, %cst_57 : f32
    %129 = tpu.iota {dimensions = array<i32: 0>} : vector<8x128xi32>
    %130 = tpu.iota {dimensions = array<i32: 1>} : vector<8x128xi32>
    %c0_i32 = arith.constant 0 : i32
    %131 = vector.broadcast %c0_i32 : i32 to vector<8x128xi32>
    %132 = arith.cmpi eq, %129, %131 : vector<8x128xi32>
    %c0_i32_58 = arith.constant 0 : i32
    %133 = vector.broadcast %c0_i32_58 : i32 to vector<8x128xi32>
    %134 = arith.cmpi eq, %130, %133 : vector<8x128xi32>
    %135 = arith.andi %132, %134 : vector<8x128xi1>
    %c1_i32 = arith.constant 1 : i32
    %136 = vector.broadcast %c1_i32 : i32 to vector<8x128xi32>
    %137 = arith.cmpi eq, %130, %136 : vector<8x128xi32>
    %138 = arith.andi %132, %137 : vector<8x128xi1>
    %c2_i32 = arith.constant 2 : i32
    %139 = vector.broadcast %c2_i32 : i32 to vector<8x128xi32>
    %140 = arith.cmpi eq, %130, %139 : vector<8x128xi32>
    %141 = arith.andi %132, %140 : vector<8x128xi1>
    %c3_i32 = arith.constant 3 : i32
    %142 = vector.broadcast %c3_i32 : i32 to vector<8x128xi32>
    %143 = arith.cmpi eq, %130, %142 : vector<8x128xi32>
    %144 = arith.andi %132, %143 : vector<8x128xi1>
    %cst_59 = arith.constant 0.000000e+00 : f32
    %145 = vector.broadcast %128 : f32 to vector<8x128xf32>
    %146 = vector.broadcast %cst_59 : f32 to vector<8x128xf32>
    %147 = arith.select %144, %145, %146 : vector<8x128xi1>, vector<8x128xf32>
    %148 = vector.broadcast %49 : f32 to vector<8x128xf32>
    %149 = arith.select %141, %148, %147 : vector<8x128xi1>, vector<8x128xf32>
    %150 = vector.broadcast %118 : f32 to vector<8x128xf32>
    %151 = arith.select %138, %150, %149 : vector<8x128xi1>, vector<8x128xf32>
    %152 = vector.broadcast %44 : f32 to vector<8x128xf32>
    %153 = arith.select %135, %152, %151 : vector<8x128xi1>, vector<8x128xf32>
    %c0_60 = arith.constant 0 : index
    %c0_61 = arith.constant 0 : index
    %c0_62 = arith.constant 0 : index
    %154 = vector.load %arg11[%c0_60, %c0_61, %c0_62] : memref<1x8x128xf32, #tpu.memory_space<vmem>>, vector<1x8x128xf32>
    %155 = vector.shape_cast %154 : vector<1x8x128xf32> to vector<8x128xf32>
    %156 = vector.shape_cast %153 : vector<8x128xf32> to vector<1x8x128xf32>
    tpu.vector_store %arg11[%c0_60, %c0_61, %c0_62], %156 {strides = array<i32>} : memref<1x8x128xf32, #tpu.memory_space<vmem>>, vector<1x8x128xf32>,
    return
  }
  func.func @transform_0(%arg0: i32) -> (i32, i32, i32) {
    %c0_i32 = arith.constant 0 : i32
    %c0_i32_0 = arith.constant 0 : i32
    %c0_i32_1 = arith.constant 0 : i32
    return %arg0, %c0_i32, %c0_i32_0 : i32, i32, i32
  }
  func.func @transform_1(%arg0: i32) -> (i32, i32, i32) {
    %c0_i32 = arith.constant 0 : i32
    %c0_i32_0 = arith.constant 0 : i32
    %c0_i32_1 = arith.constant 0 : i32
    return %arg0, %c0_i32, %c0_i32_0 : i32, i32, i32
  }
  func.func @transform_2(%arg0: i32) -> (i32, i32) {
    %c0_i32 = arith.constant 0 : i32
    %c0_i32_0 = arith.constant 0 : i32
    %c0_i32_1 = arith.constant 0 : i32
    return %c0_i32, %c0_i32_0 : i32, i32
  }
  func.func @transform_3(%arg0: i32) -> (i32, i32) {
    %c0_i32 = arith.constant 0 : i32
    %c0_i32_0 = arith.constant 0 : i32
    %c0_i32_1 = arith.constant 0 : i32
    return %c0_i32, %c0_i32_0 : i32, i32
  }
  func.func @transform_4(%arg0: i32) -> (i32, i32) {
    %c0_i32 = arith.constant 0 : i32
    %c0_i32_0 = arith.constant 0 : i32
    %c0_i32_1 = arith.constant 0 : i32
    return %c0_i32, %c0_i32_0 : i32, i32
  }
  func.func @transform_5(%arg0: i32) -> (i32, i32) {
    %c0_i32 = arith.constant 0 : i32
    %c0_i32_0 = arith.constant 0 : i32
    %c0_i32_1 = arith.constant 0 : i32
    return %c0_i32, %c0_i32_0 : i32, i32
  }
  func.func @transform_6(%arg0: i32) -> (i32, i32) {
    %c0_i32 = arith.constant 0 : i32
    %c0_i32_0 = arith.constant 0 : i32
    %c0_i32_1 = arith.constant 0 : i32
    return %c0_i32, %c0_i32_0 : i32, i32
  }
  func.func @transform_7(%arg0: i32) -> (i32, i32) {
    %c0_i32 = arith.constant 0 : i32
    %c0_i32_0 = arith.constant 0 : i32
    %c0_i32_1 = arith.constant 0 : i32
    return %c0_i32, %c0_i32_0 : i32, i32
  }
  func.func @transform_8(%arg0: i32) -> (i32, i32) {
    %c0_i32 = arith.constant 0 : i32
    %c0_i32_0 = arith.constant 0 : i32
    %c0_i32_1 = arith.constant 0 : i32
    return %c0_i32, %c0_i32_0 : i32, i32
  }
  func.func @transform_9(%arg0: i32) -> (i32, i32) {
    %c0_i32 = arith.constant 0 : i32
    %c0_i32_0 = arith.constant 0 : i32
    %c0_i32_1 = arith.constant 0 : i32
    return %c0_i32, %c0_i32_0 : i32, i32
  }
  func.func @transform_10(%arg0: i32) -> (i32, i32, i32) {
    %c0_i32 = arith.constant 0 : i32
    %c0_i32_0 = arith.constant 0 : i32
    %c0_i32_1 = arith.constant 0 : i32
    return %arg0, %c0_i32, %c0_i32_0 : i32, i32, i32
  }
}

</mosaic_0001>

<llo_original>
// kernel: tpu_custom_call.1
$region0: #{tpu_custom_call.1}
  #allocation0 [shape = 'u32[]', space=smem, size = 0x4, offset = 0x4, fixed_abs, tag = 'smem constant byte address 0x4 - core index']
  #allocation1 [shape = 'u32[144,128]{1,0:T(1,128)}', space=vmem, size = 0x12000, scoped, tag = 'internal scratch']
  %s0 = inlined_call_operand.hbm [shape: f32[1,16,128], index: 0, kind: input, shape index: {}]
  %s1 = inlined_call_operand.hbm [shape: f32[1,16,128], index: 1, kind: input, shape index: {}]
  %s2 = inlined_call_operand.hbm [shape: f32[16,16], index: 2, kind: input, shape index: {}]
  %s3 = inlined_call_operand.hbm [shape: f32[16,16], index: 3, kind: input, shape index: {}]
  %s4 = inlined_call_operand.hbm [shape: f32[128,128], index: 4, kind: input, shape index: {}]
  %s5 = inlined_call_operand.hbm [shape: f32[128,128], index: 5, kind: input, shape index: {}]
  %s6 = inlined_call_operand.hbm [shape: f32[128,128], index: 6, kind: input, shape index: {}]
  %s7 = inlined_call_operand.vmem [shape: f32[16,128], index: 7, kind: input, shape index: {}]
  %s8 = inlined_call_operand.hbm [shape: f32[16,128], index: 8, kind: input, shape index: {}]
  %s9 = inlined_call_operand.hbm [shape: f32[128,128], index: 9, kind: input, shape index: {}]
  %s10 = inlined_call_operand.hbm [shape: f32[1,8,128], index: 10, kind: output, shape index: {}]
  %s11 = sld [smem:[#allocation0]]
  $region86: #{tpu_custom_call.1} parent=0
    _
  %s13 = ssub.s32 1, %s11
  %s14 = scalar_select 0, %s13, %s11
  $region1: #{tpu_custom_call.1} parent=0
    #allocation2 [shape = 'u8[8192]{0}', space=vmem, size = 0x2000, scoped, tag = 'input window, operand 0, single buffered']
    #allocation3 [shape = 's32[1]{0}', space=sflag, size = 0x4, scoped, tag = 'scoped memory for tpu_custom_call.1']
    #allocation4 [shape = 's32[1]{0}', space=sflag, size = 0x4, scoped, tag = 'scoped memory for tpu_custom_call.1']
    #allocation5 [shape = 'u8[8192]{0}', space=vmem, size = 0x2000, scoped, tag = 'input window, operand 1, single buffered']
    #allocation6 [shape = 's32[1]{0}', space=sflag, size = 0x4, scoped, tag = 'scoped memory for tpu_custom_call.1']
    #allocation7 [shape = 'u8[8192]{0}', space=vmem, size = 0x2000, scoped, tag = 'input window, operand 2, single buffered']
    #allocation8 [shape = 'u8[8192]{0}', space=vmem, size = 0x2000, scoped, tag = 'input window, operand 3, single buffered']
    #allocation9 [shape = 's32[1]{0}', space=sflag, size = 0x4, scoped, tag = 'scoped memory for tpu_custom_call.1']
    #allocation10 [shape = 'u8[65536]{0}', space=vmem, size = 0x10000, scoped, tag = 'input window, operand 4, single buffered']
    #allocation11 [shape = 'u8[65536]{0}', space=vmem, size = 0x10000, scoped, tag = 'input window, operand 5, single buffered']
    #allocation12 [shape = 's32[1]{0}', space=sflag, size = 0x4, scoped, tag = 'scoped memory for tpu_custom_call.1']
    #allocation13 [shape = 'u8[65536]{0}', space=vmem, size = 0x10000, scoped, tag = 'input window, operand 6, single buffered']
    #allocation14 [shape = 'u8[8192]{0}', space=vmem, size = 0x2000, scoped, tag = 'input window, operand 8, single buffered']
    #allocation15 [shape = 's32[1]{0}', space=sflag, size = 0x4, scoped, tag = 'scoped memory for tpu_custom_call.1']
    #allocation16 [shape = 'u8[65536]{0}', space=vmem, size = 0x10000, scoped, tag = 'input window, operand 9, single buffered']
    #allocation17 [shape = 'u8[4096]{0}', space=vmem, size = 0x1000, scoped, tag = 'output window, operand 0, single buffered']
    %15 = vsyncpa [#allocation3], 0
    %16 = vsyncpa [#allocation6], 0
    %17 = vsyncpa [#allocation9], 0
    %18 = vsyncpa [#allocation12], 0
    %19 = vsyncpa [#allocation15], 0
    %20 = vsyncpa [#allocation4], 0
    // Predicated region
    $region2: #{tpu_custom_call.1} parent=1 // pred_check
      _
    $region3: #{tpu_custom_call.1} parent=1 // pred_check_branch
      %22 = sbr.rel (0) target = $region5
    $region4: #{tpu_custom_call.1} parent=1 // pred_region
      %s24 = ssub.s32 256, 256
      %25 = vsyncadd [#allocation3], %s24
      %s26 = sshll.u32 [#allocation2], 4
      %s27 = int_to_ptr.vmem [resolvable:$true] %s26
      %32 = dma.hbm_to_vmem [thread:$0]  %s0, 256, %s27, [#allocation3], 128, 128, 8
    $region5: #{tpu_custom_call.1} parent=1 // pred_fallthru
      _
    // Predicated region
    $region6: #{tpu_custom_call.1} parent=1 // pred_check
      _
    $region7: #{tpu_custom_call.1} parent=1 // pred_check_branch
      %34 = sbr.rel (0) target = $region9
    $region8: #{tpu_custom_call.1} parent=1 // pred_region
      %s36 = ssub.s32 256, 256
      %37 = vsyncadd [#allocation6], %s36
      %s38 = sshll.u32 [#allocation5], 4
      %s39 = int_to_ptr.vmem [resolvable:$true] %s38
      %44 = dma.hbm_to_vmem [thread:$0]  %s1, 256, %s39, [#allocation6], 128, 128, 8
    $region9: #{tpu_custom_call.1} parent=1 // pred_fallthru
      _
    // Predicated region
    $region10: #{tpu_custom_call.1} parent=1 // pred_check
      _
    $region11: #{tpu_custom_call.1} parent=1 // pred_check_branch
      %46 = sbr.rel (0) target = $region13
    $region12: #{tpu_custom_call.1} parent=1 // pred_region
      %s48 = ssub.s32 256, 256
      %49 = vsyncadd [#allocation6], %s48
      %s50 = sshll.u32 [#allocation7], 4
      %s51 = int_to_ptr.vmem [resolvable:$true] %s50
      %56 = dma.hbm_to_vmem [thread:$0]  %s2, 256, %s51, [#allocation6], 128, 128, 8
    $region13: #{tpu_custom_call.1} parent=1 // pred_fallthru
      _
    // Predicated region
    $region14: #{tpu_custom_call.1} parent=1 // pred_check
      _
    $region15: #{tpu_custom_call.1} parent=1 // pred_check_branch
      %58 = sbr.rel (0) target = $region17
    $region16: #{tpu_custom_call.1} parent=1 // pred_region
      %s60 = ssub.s32 256, 256
      %61 = vsyncadd [#allocation9], %s60
      %s62 = sshll.u32 [#allocation8], 4
      %s63 = int_to_ptr.vmem [resolvable:$true] %s62
      %68 = dma.hbm_to_vmem [thread:$0]  %s3, 256, %s63, [#allocation9], 128, 128, 8
    $region17: #{tpu_custom_call.1} parent=1 // pred_fallthru
      _
    // Predicated region
    $region18: #{tpu_custom_call.1} parent=1 // pred_check
      _
    $region19: #{tpu_custom_call.1} parent=1 // pred_check_branch
      %70 = sbr.rel (0) target = $region21
    $region20: #{tpu_custom_call.1} parent=1 // pred_region
      %s72 = ssub.s32 2048, 2048
      %73 = vsyncadd [#allocation9], %s72
      %s74 = sshll.u32 [#allocation10], 4
      %s75 = int_to_ptr.vmem [resolvable:$true] %s74
      %80 = dma.hbm_to_vmem [thread:$0]  %s4, 2048, %s75, [#allocation9], 128, 128, 8
    $region21: #{tpu_custom_call.1} parent=1 // pred_fallthru
      _
    // Predicated region
    $region22: #{tpu_custom_call.1} parent=1 // pred_check
      _
    $region23: #{tpu_custom_call.1} parent=1 // pred_check_branch
      %82 = sbr.rel (0) target = $region25
    $region24: #{tpu_custom_call.1} parent=1 // pred_region
      %s84 = ssub.s32 2048, 2048
      %85 = vsyncadd [#allocation12], %s84
      %s86 = sshll.u32 [#allocation11], 4
      %s87 = int_to_ptr.vmem [resolvable:$true] %s86
      %92 = dma.hbm_to_vmem [thread:$0]  %s5, 2048, %s87, [#allocation12], 128, 128, 8
    $region25: #{tpu_custom_call.1} parent=1 // pred_fallthru
      _
    // Predicated region
    $region26: #{tpu_custom_call.1} parent=1 // pred_check
      _
    $region27: #{tpu_custom_call.1} parent=1 // pred_check_branch
      %94 = sbr.rel (0) target = $region29
    $region28: #{tpu_custom_call.1} parent=1 // pred_region
      %s96 = ssub.s32 2048, 2048
      %97 = vsyncadd [#allocation12], %s96
      %s98 = sshll.u32 [#allocation13], 4
      %s99 = int_to_ptr.vmem [resolvable:$true] %s98
      %104 = dma.hbm_to_vmem [thread:$0]  %s6, 2048, %s99, [#allocation12], 128, 128, 8
    $region29: #{tpu_custom_call.1} parent=1 // pred_fallthru
      _
    // Predicated region
    $region30: #{tpu_custom_call.1} parent=1 // pred_check
      _
    $region31: #{tpu_custom_call.1} parent=1 // pred_check_branch
      %106 = sbr.rel (0) target = $region33
    $region32: #{tpu_custom_call.1} parent=1 // pred_region
      _
    $region33: #{tpu_custom_call.1} parent=1 // pred_fallthru
      _
    // Predicated region
    $region34: #{tpu_custom_call.1} parent=1 // pred_check
      _
    $region35: #{tpu_custom_call.1} parent=1 // pred_check_branch
      %108 = sbr.rel (0) target = $region37
    $region36: #{tpu_custom_call.1} parent=1 // pred_region
      %s110 = ssub.s32 256, 256
      %111 = vsyncadd [#allocation15], %s110
      %s112 = sshll.u32 [#allocation14], 4
      %s113 = int_to_ptr.vmem [resolvable:$true] %s112
      %118 = dma.hbm_to_vmem [thread:$0]  %s8, 256, %s113, [#allocation15], 128, 128, 8
    $region37: #{tpu_custom_call.1} parent=1 // pred_fallthru
      _
    // Predicated region
    $region38: #{tpu_custom_call.1} parent=1 // pred_check
      _
    $region39: #{tpu_custom_call.1} parent=1 // pred_check_branch
      %120 = sbr.rel (0) target = $region41
    $region40: #{tpu_custom_call.1} parent=1 // pred_region
      %s122 = ssub.s32 2048, 2048
      %123 = vsyncadd [#allocation15], %s122
      %s124 = sshll.u32 [#allocation16], 4
      %s125 = int_to_ptr.vmem [resolvable:$true] %s124
      %130 = dma.hbm_to_vmem [thread:$0]  %s9, 2048, %s125, [#allocation15], 128, 128, 8
    $region41: #{tpu_custom_call.1} parent=1 // pred_fallthru
      _
    // Predicated region
    $region42: #{tpu_custom_call.1} parent=1 // pred_check
      _
    $region43: #{tpu_custom_call.1} parent=1 // pred_check_branch
      %132 = sbr.rel (0) target = $region45
    $region44: #{tpu_custom_call.1} parent=1 // pred_region
      %133 = dma.done [#allocation3], 256
    $region45: #{tpu_custom_call.1} parent=1 // pred_fallthru
      _
    // Predicated region
    $region46: #{tpu_custom_call.1} parent=1 // pred_check
      _
    $region47: #{tpu_custom_call.1} parent=1 // pred_check_branch
      %135 = sbr.rel (0) target = $region49
    $region48: #{tpu_custom_call.1} parent=1 // pred_region
      %136 = dma.done [#allocation6], 256
    $region49: #{tpu_custom_call.1} parent=1 // pred_fallthru
      _
    // Predicated region
    $region50: #{tpu_custom_call.1} parent=1 // pred_check
      _
    $region51: #{tpu_custom_call.1} parent=1 // pred_check_branch
      %138 = sbr.rel (0) target = $region53
    $region52: #{tpu_custom_call.1} parent=1 // pred_region
      %139 = dma.done [#allocation6], 256
    $region53: #{tpu_custom_call.1} parent=1 // pred_fallthru
      _
    // Predicated region
    $region54: #{tpu_custom_call.1} parent=1 // pred_check
      _
    $region55: #{tpu_custom_call.1} parent=1 // pred_check_branch
      %141 = sbr.rel (0) target = $region57
    $region56: #{tpu_custom_call.1} parent=1 // pred_region
      %142 = dma.done [#allocation9], 256
    $region57: #{tpu_custom_call.1} parent=1 // pred_fallthru
      _
    // Predicated region
    $region58: #{tpu_custom_call.1} parent=1 // pred_check
      _
    $region59: #{tpu_custom_call.1} parent=1 // pred_check_branch
      %144 = sbr.rel (0) target = $region61
    $region60: #{tpu_custom_call.1} parent=1 // pred_region
      %145 = dma.done [#allocation9], 2048
    $region61: #{tpu_custom_call.1} parent=1 // pred_fallthru
      _
    // Predicated region
    $region62: #{tpu_custom_call.1} parent=1 // pred_check
      _
    $region63: #{tpu_custom_call.1} parent=1 // pred_check_branch
      %147 = sbr.rel (0) target = $region65
    $region64: #{tpu_custom_call.1} parent=1 // pred_region
      %148 = dma.done [#allocation12], 2048
    $region65: #{tpu_custom_call.1} parent=1 // pred_fallthru
      _
    // Predicated region
    $region66: #{tpu_custom_call.1} parent=1 // pred_check
      _
    $region67: #{tpu_custom_call.1} parent=1 // pred_check_branch
      %150 = sbr.rel (0) target = $region69
    $region68: #{tpu_custom_call.1} parent=1 // pred_region
      %151 = dma.done [#allocation12], 2048
    $region69: #{tpu_custom_call.1} parent=1 // pred_fallthru
      _
    // Predicated region
    $region70: #{tpu_custom_call.1} parent=1 // pred_check
      _
    $region71: #{tpu_custom_call.1} parent=1 // pred_check_branch
      %153 = sbr.rel (0) target = $region73
    $region72: #{tpu_custom_call.1} parent=1 // pred_region
      %154 = dma.done [#allocation15], 256
    $region73: #{tpu_custom_call.1} parent=1 // pred_fallthru
      _
    // Predicated region
    $region74: #{tpu_custom_call.1} parent=1 // pred_check
      _
    $region75: #{tpu_custom_call.1} parent=1 // pred_check_branch
      %156 = sbr.rel (0) target = $region77
    $region76: #{tpu_custom_call.1} parent=1 // pred_region
      %157 = dma.done [#allocation15], 2048
    $region77: #{tpu_custom_call.1} parent=1 // pred_fallthru
      _
    %v158 = vld [vmem:[#allocation7] sm:$0xff]
    %v159 = vld [vmem:[#allocation7 + $0x8] sm:$0xff]
    %v160 = vld [vmem:[#allocation8] sm:$0xff]
    %v161 = vld [vmem:[#allocation8 + $0x8] sm:$0xff]
    %v162 = vld [vmem:[#allocation10] sm:$0xff]
    %v163 = vld [vmem:[#allocation10 + $0x8] sm:$0xff]
    %v164 = vld [vmem:[#allocation10 + $0x10] sm:$0xff]
    %v165 = vld [vmem:[#allocation10 + $0x18] sm:$0xff]
    %v166 = vld [vmem:[#allocation10 + $0x20] sm:$0xff]
    %v167 = vld [vmem:[#allocation10 + $0x28] sm:$0xff]
    %v168 = vld [vmem:[#allocation10 + $0x30] sm:$0xff]
    %v169 = vld [vmem:[#allocation10 + $0x38] sm:$0xff]
    %v170 = vld [vmem:[#allocation10 + $0x40] sm:$0xff]
    %v171 = vld [vmem:[#allocation10 + $0x48] sm:$0xff]
    %v172 = vld [vmem:[#allocation10 + $0x50] sm:$0xff]
    %v173 = vld [vmem:[#allocation10 + $0x58] sm:$0xff]
    %v174 = vld [vmem:[#allocation10 + $0x60] sm:$0xff]
    %v175 = vld [vmem:[#allocation10 + $0x68] sm:$0xff]
    %v176 = vld [vmem:[#allocation10 + $0x70] sm:$0xff]
    %v177 = vld [vmem:[#allocation10 + $0x78] sm:$0xff]
    %v178 = vld [vmem:[#allocation11] sm:$0xff]
    %v179 = vld [vmem:[#allocation11 + $0x8] sm:$0xff]
    %v180 = vld [vmem:[#allocation11 + $0x10] sm:$0xff]
    %v181 = vld [vmem:[#allocation11 + $0x18] sm:$0xff]
    %v182 = vld [vmem:[#allocation11 + $0x20] sm:$0xff]
    %v183 = vld [vmem:[#allocation11 + $0x28] sm:$0xff]
    %v184 = vld [vmem:[#allocation11 + $0x30] sm:$0xff]
    %v185 = vld [vmem:[#allocation11 + $0x38] sm:$0xff]
    %v186 = vld [vmem:[#allocation11 + $0x40] sm:$0xff]
    %v187 = vld [vmem:[#allocation11 + $0x48] sm:$0xff]
    %v188 = vld [vmem:[#allocation11 + $0x50] sm:$0xff]
    %v189 = vld [vmem:[#allocation11 + $0x58] sm:$0xff]
    %v190 = vld [vmem:[#allocation11 + $0x60] sm:$0xff]
    %v191 = vld [vmem:[#allocation11 + $0x68] sm:$0xff]
    %v192 = vld [vmem:[#allocation11 + $0x70] sm:$0xff]
    %v193 = vld [vmem:[#allocation11 + $0x78] sm:$0xff]
    %v194 = vld [vmem:[#allocation13] sm:$0xff]
    %v195 = vld [vmem:[#allocation13 + $0x8] sm:$0xff]
    %v196 = vld [vmem:[#allocation13 + $0x10] sm:$0xff]
    %v197 = vld [vmem:[#allocation13 + $0x18] sm:$0xff]
    %v198 = vld [vmem:[#allocation13 + $0x20] sm:$0xff]
    %v199 = vld [vmem:[#allocation13 + $0x28] sm:$0xff]
    %v200 = vld [vmem:[#allocation13 + $0x30] sm:$0xff]
    %v201 = vld [vmem:[#allocation13 + $0x38] sm:$0xff]
    %v202 = vld [vmem:[#allocation13 + $0x40] sm:$0xff]
    %v203 = vld [vmem:[#allocation13 + $0x48] sm:$0xff]
    %v204 = vld [vmem:[#allocation13 + $0x50] sm:$0xff]
    %v205 = vld [vmem:[#allocation13 + $0x58] sm:$0xff]
    %v206 = vld [vmem:[#allocation13 + $0x60] sm:$0xff]
    %v207 = vld [vmem:[#allocation13 + $0x68] sm:$0xff]
    %v208 = vld [vmem:[#allocation13 + $0x70] sm:$0xff]
    %v209 = vld [vmem:[#allocation13 + $0x78] sm:$0xff]
    %v210 = vld [vmem:[%s7] sm:$0xff]
    %v211 = vld [vmem:[%s7 + $0x8] sm:$0xff]
    %v212 = vld [vmem:[#allocation14] sm:$0xff]
    %v213 = vld [vmem:[#allocation14 + $0x8] sm:$0xff]
    %v214 = vld [vmem:[#allocation16] sm:$0xff]
    %v215 = vld [vmem:[#allocation16 + $0x8] sm:$0xff]
    %v216 = vld [vmem:[#allocation16 + $0x10] sm:$0xff]
    %v217 = vld [vmem:[#allocation16 + $0x18] sm:$0xff]
    %v218 = vld [vmem:[#allocation16 + $0x20] sm:$0xff]
    %v219 = vld [vmem:[#allocation16 + $0x28] sm:$0xff]
    %v220 = vld [vmem:[#allocation16 + $0x30] sm:$0xff]
    %v221 = vld [vmem:[#allocation16 + $0x38] sm:$0xff]
    %v222 = vld [vmem:[#allocation16 + $0x40] sm:$0xff]
    %v223 = vld [vmem:[#allocation16 + $0x48] sm:$0xff]
    %v224 = vld [vmem:[#allocation16 + $0x50] sm:$0xff]
    %v225 = vld [vmem:[#allocation16 + $0x58] sm:$0xff]
    %v226 = vld [vmem:[#allocation16 + $0x60] sm:$0xff]
    %v227 = vld [vmem:[#allocation16 + $0x68] sm:$0xff]
    %v228 = vld [vmem:[#allocation16 + $0x70] sm:$0xff]
    %v229 = vld [vmem:[#allocation16 + $0x78] sm:$0xff]
    %v230 = vld [vmem:[#allocation2] sm:$0xff]
    %v231 = vld [vmem:[#allocation2 + $0x8] sm:$0xff]
    %vm232 = vcmask 130048
    %v234 = vsel %vm232, %v158, 0
    %v237 = vsel %vm232, %v159, 0
    %239 = vmatprep.subr.mxu0 0.0
    %240 = vmatpush1.msra.mxu0 %v230
    %241 = vmatprep.subr.mxu0 0.0
    %242 = vmatpush1.msra.mxu0 %v231
    %243 = vmatprep.subr.mxu0 0.0
    %244 = vmatpush1.msra.mxu0 0.0
    %245 = vmatprep.subr.mxu0 0.0
    %246 = vmatpush1.msra.mxu0 0.0
    %247 = vmatprep.subr.mxu0 0.0
    %248 = vmatpush1.msra.mxu0 0.0
    %249 = vmatprep.subr.mxu0 0.0
    %250 = vmatpush1.msra.mxu0 0.0
    %251 = vmatprep.subr.mxu0 0.0
    %252 = vmatpush1.msra.mxu0 0.0
    %253 = vmatprep.subr.mxu0 0.0
    %254 = vmatpush1.msra.mxu0 0.0
    %255 = vmatprep.subr.mxu0 0.0
    %256 = vmatpush1.msra.mxu0 0.0
    %257 = vmatprep.subr.mxu0 0.0
    %258 = vmatpush1.msra.mxu0 0.0
    %259 = vmatprep.subr.mxu0 0.0
    %260 = vmatpush1.msra.mxu0 0.0
    %261 = vmatprep.subr.mxu0 0.0
    %262 = vmatpush1.msra.mxu0 0.0
    %263 = vmatprep.subr.mxu0 0.0
    %264 = vmatpush1.msra.mxu0 0.0
    %265 = vmatprep.subr.mxu0 0.0
    %266 = vmatpush1.msra.mxu0 0.0
    %267 = vmatprep.subr.mxu0 0.0
    %268 = vmatpush1.msra.mxu0 0.0
    %269 = vmatprep.subr.mxu0 0.0
    %270 = vmatpush1.msra.mxu0 0.0
    %271 = vmatprep.subr.mxu0 0.0
    %272 = vmatpush1.msra.mxu0 0.0
    %273 = vmatprep.subr.mxu0 0.0
    %274 = vmatpush1.msra.mxu0 0.0
    %275 = vmatprep.subr.mxu0 0.0
    %276 = vmatpush1.msra.mxu0 0.0
    %277 = vmatprep.subr.mxu0 0.0
    %278 = vmatpush1.msra.mxu0 0.0
    %279 = vmatprep.subr.mxu0 0.0
    %280 = vmatpush1.msra.mxu0 0.0
    %281 = vmatprep.subr.mxu0 0.0
    %282 = vmatpush1.msra.mxu0 0.0
    %283 = vmatprep.subr.mxu0 0.0
    %284 = vmatpush1.msra.mxu0 0.0
    %285 = vmatprep.subr.mxu0 0.0
    %286 = vmatpush1.msra.mxu0 0.0
    %287 = vmatprep.subr.mxu0 0.0
    %288 = vmatpush1.msra.mxu0 0.0
    %289 = vmatprep.subr.mxu0 0.0
    %290 = vmatpush1.msra.mxu0 0.0
    %291 = vmatprep.subr.mxu0 0.0
    %292 = vmatpush1.msra.mxu0 0.0
    %293 = vmatprep.subr.mxu0 0.0
    %294 = vmatpush1.msra.mxu0 0.0
    %295 = vmatprep.subr.mxu0 0.0
    %296 = vmatpush1.msra.mxu0 0.0
    %297 = vmatprep.subr.mxu0 0.0
    %298 = vmatpush1.msra.mxu0 0.0
    %299 = vmatprep.subr.mxu0 0.0
    %300 = vmatpush1.msra.mxu0 0.0
    %301 = vmatprep.subr.mxu0 0.0
    %302 = vmatpush1.msra.mxu0 0.0
    %303 = vmatprep.mubr.f32.mxu0 0.0
    %304 = vmatmul.mubr.f32.gmra.mrb[0].mxu0 %v234
    %v305 = vpop.f32.mrb[0].mxu0
    %v306 = vadd.f32 0.0, %v305
    %v307 = vpop.f32.mrb[0].mxu0
    %308 = vmatprep.mubr.f32.mxu0 0.0
    %309 = vmatmul.mubr.f32.gmra.mrb[0].mxu0 %v237
    %v310 = vpop.f32.mrb[0].mxu0
    %v311 = vadd.f32 0.0, %v310
    %v312 = vpop.f32.mrb[0].mxu0
    %313 = vdwg.mxu0
    %v315 = vsel %vm232, %v160, 0
    %v318 = vsel %vm232, %v161, 0
    %320 = vmatprep.subr.mxu0 0.0
    %321 = vmatpush1.msra.mxu0 %v230
    %322 = vmatprep.subr.mxu0 0.0
    %323 = vmatpush1.msra.mxu0 %v231
    %324 = vmatprep.subr.mxu0 0.0
    %325 = vmatpush1.msra.mxu0 0.0
    %326 = vmatprep.subr.mxu0 0.0
    %327 = vmatpush1.msra.mxu0 0.0
    %328 = vmatprep.subr.mxu0 0.0
    %329 = vmatpush1.msra.mxu0 0.0
    %330 = vmatprep.subr.mxu0 0.0
    %331 = vmatpush1.msra.mxu0 0.0
    %332 = vmatprep.subr.mxu0 0.0
    %333 = vmatpush1.msra.mxu0 0.0
    %334 = vmatprep.subr.mxu0 0.0
    %335 = vmatpush1.msra.mxu0 0.0
    %336 = vmatprep.subr.mxu0 0.0
    %337 = vmatpush1.msra.mxu0 0.0
    %338 = vmatprep.subr.mxu0 0.0
    %339 = vmatpush1.msra.mxu0 0.0
    %340 = vmatprep.subr.mxu0 0.0
    %341 = vmatpush1.msra.mxu0 0.0
    %342 = vmatprep.subr.mxu0 0.0
    %343 = vmatpush1.msra.mxu0 0.0
    %344 = vmatprep.subr.mxu0 0.0
    %345 = vmatpush1.msra.mxu0 0.0
    %346 = vmatprep.subr.mxu0 0.0
    %347 = vmatpush1.msra.mxu0 0.0
    %348 = vmatprep.subr.mxu0 0.0
    %349 = vmatpush1.msra.mxu0 0.0
    %350 = vmatprep.subr.mxu0 0.0
    %351 = vmatpush1.msra.mxu0 0.0
    %352 = vmatprep.subr.mxu0 0.0
    %353 = vmatpush1.msra.mxu0 0.0
    %354 = vmatprep.subr.mxu0 0.0
    %355 = vmatpush1.msra.mxu0 0.0
    %356 = vmatprep.subr.mxu0 0.0
    %357 = vmatpush1.msra.mxu0 0.0
    %358 = vmatprep.subr.mxu0 0.0
    %359 = vmatpush1.msra.mxu0 0.0
    %360 = vmatprep.subr.mxu0 0.0
    %361 = vmatpush1.msra.mxu0 0.0
    %362 = vmatprep.subr.mxu0 0.0
    %363 = vmatpush1.msra.mxu0 0.0
    %364 = vmatprep.subr.mxu0 0.0
    %365 = vmatpush1.msra.mxu0 0.0
    %366 = vmatprep.subr.mxu0 0.0
    %367 = vmatpush1.msra.mxu0 0.0
    %368 = vmatprep.subr.mxu0 0.0
    %369 = vmatpush1.msra.mxu0 0.0
    %370 = vmatprep.subr.mxu0 0.0
    %371 = vmatpush1.msra.mxu0 0.0
    %372 = vmatprep.subr.mxu0 0.0
    %373 = vmatpush1.msra.mxu0 0.0
    %374 = vmatprep.subr.mxu0 0.0
    %375 = vmatpush1.msra.mxu0 0.0
    %376 = vmatprep.subr.mxu0 0.0
    %377 = vmatpush1.msra.mxu0 0.0
    %378 = vmatprep.subr.mxu0 0.0
    %379 = vmatpush1.msra.mxu0 0.0
    %380 = vmatprep.subr.mxu0 0.0
    %381 = vmatpush1.msra.mxu0 0.0
    %382 = vmatprep.subr.mxu0 0.0
    %383 = vmatpush1.msra.mxu0 0.0
    %384 = vmatprep.mubr.f32.mxu0 0.0
    %385 = vmatmul.mubr.f32.gmra.mrb[0].mxu0 %v315
    %v386 = vpop.f32.mrb[0].mxu0
    %v387 = vadd.f32 0.0, %v386
    %v388 = vpop.f32.mrb[0].mxu0
    %389 = vmatprep.mubr.f32.mxu0 0.0
    %390 = vmatmul.mubr.f32.gmra.mrb[0].mxu0 %v318
    %v391 = vpop.f32.mrb[0].mxu0
    %v392 = vadd.f32 0.0, %v391
    %v393 = vpop.f32.mrb[0].mxu0
    %394 = vdwg.mxu0
    %395 = vmatprep.subr.mxu0 0.0
    %396 = vmatpush1.msra.mxu0 %v162
    %397 = vmatprep.subr.mxu0 0.0
    %398 = vmatpush1.msra.mxu0 %v163
    %399 = vmatprep.subr.mxu0 0.0
    %400 = vmatpush1.msra.mxu0 %v164
    %401 = vmatprep.subr.mxu0 0.0
    %402 = vmatpush1.msra.mxu0 %v165
    %403 = vmatprep.subr.mxu0 0.0
    %404 = vmatpush1.msra.mxu0 %v166
    %405 = vmatprep.subr.mxu0 0.0
    %406 = vmatpush1.msra.mxu0 %v167
    %407 = vmatprep.subr.mxu0 0.0
    %408 = vmatpush1.msra.mxu0 %v168
    %409 = vmatprep.subr.mxu0 0.0
    %410 = vmatpush1.msra.mxu0 %v169
    %411 = vmatprep.subr.mxu0 0.0
    %412 = vmatpush1.msra.mxu0 %v170
    %413 = vmatprep.subr.mxu0 0.0
    %414 = vmatpush1.msra.mxu0 %v171
    %415 = vmatprep.subr.mxu0 0.0
    %416 = vmatpush1.msra.mxu0 %v172
    %417 = vmatprep.subr.mxu0 0.0
    %418 = vmatpush1.msra.mxu0 %v173
    %419 = vmatprep.subr.mxu0 0.0
    %420 = vmatpush1.msra.mxu0 %v174
    %421 = vmatprep.subr.mxu0 0.0
    %422 = vmatpush1.msra.mxu0 %v175
    %423 = vmatprep.subr.mxu0 0.0
    %424 = vmatpush1.msra.mxu0 %v176
    %425 = vmatprep.subr.mxu0 0.0
    %426 = vmatpush1.msra.mxu0 %v177
    %427 = vmatprep.subr.mxu0 0.0
    %428 = vmatpush1.msra.mxu0 0.0
    %429 = vmatprep.subr.mxu0 0.0
    %430 = vmatpush1.msra.mxu0 0.0
    %431 = vmatprep.subr.mxu0 0.0
    %432 = vmatpush1.msra.mxu0 0.0
    %433 = vmatprep.subr.mxu0 0.0
    %434 = vmatpush1.msra.mxu0 0.0
    %435 = vmatprep.subr.mxu0 0.0
    %436 = vmatpush1.msra.mxu0 0.0
    %437 = vmatprep.subr.mxu0 0.0
    %438 = vmatpush1.msra.mxu0 0.0
    %439 = vmatprep.subr.mxu0 0.0
    %440 = vmatpush1.msra.mxu0 0.0
    %441 = vmatprep.subr.mxu0 0.0
    %442 = vmatpush1.msra.mxu0 0.0
    %443 = vmatprep.subr.mxu0 0.0
    %444 = vmatpush1.msra.mxu0 0.0
    %445 = vmatprep.subr.mxu0 0.0
    %446 = vmatpush1.msra.mxu0 0.0
    %447 = vmatprep.subr.mxu0 0.0
    %448 = vmatpush1.msra.mxu0 0.0
    %449 = vmatprep.subr.mxu0 0.0
    %450 = vmatpush1.msra.mxu0 0.0
    %451 = vmatprep.subr.mxu0 0.0
    %452 = vmatpush1.msra.mxu0 0.0
    %453 = vmatprep.subr.mxu0 0.0
    %454 = vmatpush1.msra.mxu0 0.0
    %455 = vmatprep.subr.mxu0 0.0
    %456 = vmatpush1.msra.mxu0 0.0
    %457 = vmatprep.subr.mxu0 0.0
    %458 = vmatpush1.msra.mxu0 0.0
    %459 = vmatprep.mubr.f32.mxu0 0.0
    %460 = vmatmul.mubr.f32.gmra.mrb[0].mxu0 %v306
    %v461 = vpop.f32.mrb[0].mxu0
    %v462 = vadd.f32 0.0, %v461
    %v463 = vpop.f32.mrb[0].mxu0
    %464 = vmatprep.mubr.f32.mxu0 0.0
    %465 = vmatmul.mubr.f32.gmra.mrb[0].mxu0 %v311
    %v466 = vpop.f32.mrb[0].mxu0
    %v467 = vadd.f32 0.0, %v466
    %v468 = vpop.f32.mrb[0].mxu0
    %469 = vdwg.mxu0
    %470 = vmatprep.subr.mxu0 0.0
    %471 = vmatpush1.msra.mxu0 %v178
    %472 = vmatprep.subr.mxu0 0.0
    %473 = vmatpush1.msra.mxu0 %v179
    %474 = vmatprep.subr.mxu0 0.0
    %475 = vmatpush1.msra.mxu0 %v180
    %476 = vmatprep.subr.mxu0 0.0
    %477 = vmatpush1.msra.mxu0 %v181
    %478 = vmatprep.subr.mxu0 0.0
    %479 = vmatpush1.msra.mxu0 %v182
    %480 = vmatprep.subr.mxu0 0.0
    %481 = vmatpush1.msra.mxu0 %v183
    %482 = vmatprep.subr.mxu0 0.0
    %483 = vmatpush1.msra.mxu0 %v184
    %484 = vmatprep.subr.mxu0 0.0
    %485 = vmatpush1.msra.mxu0 %v185
    %486 = vmatprep.subr.mxu0 0.0
    %487 = vmatpush1.msra.mxu0 %v186
    %488 = vmatprep.subr.mxu0 0.0
    %489 = vmatpush1.msra.mxu0 %v187
    %490 = vmatprep.subr.mxu0 0.0
    %491 = vmatpush1.msra.mxu0 %v188
    %492 = vmatprep.subr.mxu0 0.0
    %493 = vmatpush1.msra.mxu0 %v189
    %494 = vmatprep.subr.mxu0 0.0
    %495 = vmatpush1.msra.mxu0 %v190
    %496 = vmatprep.subr.mxu0 0.0
    %497 = vmatpush1.msra.mxu0 %v191
    %498 = vmatprep.subr.mxu0 0.0
    %499 = vmatpush1.msra.mxu0 %v192
    %500 = vmatprep.subr.mxu0 0.0
    %501 = vmatpush1.msra.mxu0 %v193
    %502 = vmatprep.subr.mxu0 0.0
    %503 = vmatpush1.msra.mxu0 0.0
    %504 = vmatprep.subr.mxu0 0.0
    %505 = vmatpush1.msra.mxu0 0.0
    %506 = vmatprep.subr.mxu0 0.0
    %507 = vmatpush1.msra.mxu0 0.0
    %508 = vmatprep.subr.mxu0 0.0
    %509 = vmatpush1.msra.mxu0 0.0
    %510 = vmatprep.subr.mxu0 0.0
    %511 = vmatpush1.msra.mxu0 0.0
    %512 = vmatprep.subr.mxu0 0.0
    %513 = vmatpush1.msra.mxu0 0.0
    %514 = vmatprep.subr.mxu0 0.0
    %515 = vmatpush1.msra.mxu0 0.0
    %516 = vmatprep.subr.mxu0 0.0
    %517 = vmatpush1.msra.mxu0 0.0
    %518 = vmatprep.subr.mxu0 0.0
    %519 = vmatpush1.msra.mxu0 0.0
    %520 = vmatprep.subr.mxu0 0.0
    %521 = vmatpush1.msra.mxu0 0.0
    %522 = vmatprep.subr.mxu0 0.0
    %523 = vmatpush1.msra.mxu0 0.0
    %524 = vmatprep.subr.mxu0 0.0
    %525 = vmatpush1.msra.mxu0 0.0
    %526 = vmatprep.subr.mxu0 0.0
    %527 = vmatpush1.msra.mxu0 0.0
    %528 = vmatprep.subr.mxu0 0.0
    %529 = vmatpush1.msra.mxu0 0.0
    %530 = vmatprep.subr.mxu0 0.0
    %531 = vmatpush1.msra.mxu0 0.0
    %532 = vmatprep.subr.mxu0 0.0
    %533 = vmatpush1.msra.mxu0 0.0
    %534 = vmatprep.mubr.f32.mxu0 0.0
    %535 = vmatmul.mubr.f32.gmra.mrb[0].mxu0 %v387
    %v536 = vpop.f32.mrb[0].mxu0
    %v537 = vadd.f32 0.0, %v536
    %v538 = vpop.f32.mrb[0].mxu0
    %539 = vmatprep.mubr.f32.mxu0 0.0
    %540 = vmatmul.mubr.f32.gmra.mrb[0].mxu0 %v392
    %v541 = vpop.f32.mrb[0].mxu0
    %v542 = vadd.f32 0.0, %v541
    %v543 = vpop.f32.mrb[0].mxu0
    %544 = vdwg.mxu0
    %v545 = vadd.f32 %v306, %v387
    %v546 = vadd.f32 %v311, %v392
    %547 = vmatprep.subr.mxu0 0.0
    %548 = vmatpush1.msra.mxu0 %v194
    %549 = vmatprep.subr.mxu0 0.0
    %550 = vmatpush1.msra.mxu0 %v195
    %551 = vmatprep.subr.mxu0 0.0
    %552 = vmatpush1.msra.mxu0 %v196
    %553 = vmatprep.subr.mxu0 0.0
    %554 = vmatpush1.msra.mxu0 %v197
    %555 = vmatprep.subr.mxu0 0.0
    %556 = vmatpush1.msra.mxu0 %v198
    %557 = vmatprep.subr.mxu0 0.0
    %558 = vmatpush1.msra.mxu0 %v199
    %559 = vmatprep.subr.mxu0 0.0
    %560 = vmatpush1.msra.mxu0 %v200
    %561 = vmatprep.subr.mxu0 0.0
    %562 = vmatpush1.msra.mxu0 %v201
    %563 = vmatprep.subr.mxu0 0.0
    %564 = vmatpush1.msra.mxu0 %v202
    %565 = vmatprep.subr.mxu0 0.0
    %566 = vmatpush1.msra.mxu0 %v203
    %567 = vmatprep.subr.mxu0 0.0
    %568 = vmatpush1.msra.mxu0 %v204
    %569 = vmatprep.subr.mxu0 0.0
    %570 = vmatpush1.msra.mxu0 %v205
    %571 = vmatprep.subr.mxu0 0.0
    %572 = vmatpush1.msra.mxu0 %v206
    %573 = vmatprep.subr.mxu0 0.0
    %574 = vmatpush1.msra.mxu0 %v207
    %575 = vmatprep.subr.mxu0 0.0
    %576 = vmatpush1.msra.mxu0 %v208
    %577 = vmatprep.subr.mxu0 0.0
    %578 = vmatpush1.msra.mxu0 %v209
    %579 = vmatprep.subr.mxu0 0.0
    %580 = vmatpush1.msra.mxu0 0.0
    %581 = vmatprep.subr.mxu0 0.0
    %582 = vmatpush1.msra.mxu0 0.0
    %583 = vmatprep.subr.mxu0 0.0
    %584 = vmatpush1.msra.mxu0 0.0
    %585 = vmatprep.subr.mxu0 0.0
    %586 = vmatpush1.msra.mxu0 0.0
    %587 = vmatprep.subr.mxu0 0.0
    %588 = vmatpush1.msra.mxu0 0.0
    %589 = vmatprep.subr.mxu0 0.0
    %590 = vmatpush1.msra.mxu0 0.0
    %591 = vmatprep.subr.mxu0 0.0
    %592 = vmatpush1.msra.mxu0 0.0
    %593 = vmatprep.subr.mxu0 0.0
    %594 = vmatpush1.msra.mxu0 0.0
    %595 = vmatprep.subr.mxu0 0.0
    %596 = vmatpush1.msra.mxu0 0.0
    %597 = vmatprep.subr.mxu0 0.0
    %598 = vmatpush1.msra.mxu0 0.0
    %599 = vmatprep.subr.mxu0 0.0
    %600 = vmatpush1.msra.mxu0 0.0
    %601 = vmatprep.subr.mxu0 0.0
    %602 = vmatpush1.msra.mxu0 0.0
    %603 = vmatprep.subr.mxu0 0.0
    %604 = vmatpush1.msra.mxu0 0.0
    %605 = vmatprep.subr.mxu0 0.0
    %606 = vmatpush1.msra.mxu0 0.0
    %607 = vmatprep.subr.mxu0 0.0
    %608 = vmatpush1.msra.mxu0 0.0
    %609 = vmatprep.subr.mxu0 0.0
    %610 = vmatpush1.msra.mxu0 0.0
    %611 = vmatprep.mubr.f32.mxu0 0.0
    %612 = vmatmul.mubr.f32.gmra.mrb[0].mxu0 %v545
    %v613 = vpop.f32.mrb[0].mxu0
    %v614 = vadd.f32 0.0, %v613
    %v615 = vpop.f32.mrb[0].mxu0
    %616 = vmatprep.mubr.f32.mxu0 0.0
    %617 = vmatmul.mubr.f32.gmra.mrb[0].mxu0 %v546
    %v618 = vpop.f32.mrb[0].mxu0
    %v619 = vadd.f32 0.0, %v618
    %v620 = vpop.f32.mrb[0].mxu0
    %621 = vdwg.mxu0
    %v622 = vsub.f32 %v462, %v537
    %v623 = vsub.f32 %v467, %v542
    %v624 = vsub.f32 %v614, %v462
    %v625 = vsub.f32 %v619, %v467
    %v626 = vsub.f32 %v624, %v537
    %v627 = vsub.f32 %v625, %v542
    %v628 = vld [vmem:[#allocation5] sm:$0xff]
    %v629 = vld [vmem:[#allocation5 + $0x8] sm:$0xff]
    %630 = vmatprep.subr.mxu0 0.0
    %631 = vmatpush1.msra.mxu0 %v628
    %632 = vmatprep.subr.mxu0 0.0
    %633 = vmatpush1.msra.mxu0 %v629
    %634 = vmatprep.subr.mxu0 0.0
    %635 = vmatpush1.msra.mxu0 0.0
    %636 = vmatprep.subr.mxu0 0.0
    %637 = vmatpush1.msra.mxu0 0.0
    %638 = vmatprep.subr.mxu0 0.0
    %639 = vmatpush1.msra.mxu0 0.0
    %640 = vmatprep.subr.mxu0 0.0
    %641 = vmatpush1.msra.mxu0 0.0
    %642 = vmatprep.subr.mxu0 0.0
    %643 = vmatpush1.msra.mxu0 0.0
    %644 = vmatprep.subr.mxu0 0.0
    %645 = vmatpush1.msra.mxu0 0.0
    %646 = vmatprep.subr.mxu0 0.0
    %647 = vmatpush1.msra.mxu0 0.0
    %648 = vmatprep.subr.mxu0 0.0
    %649 = vmatpush1.msra.mxu0 0.0
    %650 = vmatprep.subr.mxu0 0.0
    %651 = vmatpush1.msra.mxu0 0.0
    %652 = vmatprep.subr.mxu0 0.0
    %653 = vmatpush1.msra.mxu0 0.0
    %654 = vmatprep.subr.mxu0 0.0
    %655 = vmatpush1.msra.mxu0 0.0
    %656 = vmatprep.subr.mxu0 0.0
    %657 = vmatpush1.msra.mxu0 0.0
    %658 = vmatprep.subr.mxu0 0.0
    %659 = vmatpush1.msra.mxu0 0.0
    %660 = vmatprep.subr.mxu0 0.0
    %661 = vmatpush1.msra.mxu0 0.0
    %662 = vmatprep.subr.mxu0 0.0
    %663 = vmatpush1.msra.mxu0 0.0
    %664 = vmatprep.subr.mxu0 0.0
    %665 = vmatpush1.msra.mxu0 0.0
    %666 = vmatprep.subr.mxu0 0.0
    %667 = vmatpush1.msra.mxu0 0.0
    %668 = vmatprep.subr.mxu0 0.0
    %669 = vmatpush1.msra.mxu0 0.0
    %670 = vmatprep.subr.mxu0 0.0
    %671 = vmatpush1.msra.mxu0 0.0
    %672 = vmatprep.subr.mxu0 0.0
    %673 = vmatpush1.msra.mxu0 0.0
    %674 = vmatprep.subr.mxu0 0.0
    %675 = vmatpush1.msra.mxu0 0.0
    %676 = vmatprep.subr.mxu0 0.0
    %677 = vmatpush1.msra.mxu0 0.0
    %678 = vmatprep.subr.mxu0 0.0
    %679 = vmatpush1.msra.mxu0 0.0
    %680 = vmatprep.subr.mxu0 0.0
    %681 = vmatpush1.msra.mxu0 0.0
    %682 = vmatprep.subr.mxu0 0.0
    %683 = vmatpush1.msra.mxu0 0.0
    %684 = vmatprep.subr.mxu0 0.0
    %685 = vmatpush1.msra.mxu0 0.0
    %686 = vmatprep.subr.mxu0 0.0
    %687 = vmatpush1.msra.mxu0 0.0
    %688 = vmatprep.subr.mxu0 0.0
    %689 = vmatpush1.msra.mxu0 0.0
    %690 = vmatprep.subr.mxu0 0.0
    %691 = vmatpush1.msra.mxu0 0.0
    %692 = vmatprep.subr.mxu0 0.0
    %693 = vmatpush1.msra.mxu0 0.0
    %694 = vmatprep.mubr.f32.mxu0 0.0
    %695 = vmatmul.mubr.f32.gmra.mrb[0].mxu0 %v234
    %v696 = vpop.f32.mrb[0].mxu0
    %v697 = vadd.f32 0.0, %v696
    %v698 = vpop.f32.mrb[0].mxu0
    %699 = vmatprep.mubr.f32.mxu0 0.0
    %700 = vmatmul.mubr.f32.gmra.mrb[0].mxu0 %v237
    %v701 = vpop.f32.mrb[0].mxu0
    %v702 = vadd.f32 0.0, %v701
    %v703 = vpop.f32.mrb[0].mxu0
    %704 = vdwg.mxu0
    %705 = vmatprep.subr.mxu0 0.0
    %706 = vmatpush1.msra.mxu0 %v628
    %707 = vmatprep.subr.mxu0 0.0
    %708 = vmatpush1.msra.mxu0 %v629
    %709 = vmatprep.subr.mxu0 0.0
    %710 = vmatpush1.msra.mxu0 0.0
    %711 = vmatprep.subr.mxu0 0.0
    %712 = vmatpush1.msra.mxu0 0.0
    %713 = vmatprep.subr.mxu0 0.0
    %714 = vmatpush1.msra.mxu0 0.0
    %715 = vmatprep.subr.mxu0 0.0
    %716 = vmatpush1.msra.mxu0 0.0
    %717 = vmatprep.subr.mxu0 0.0
    %718 = vmatpush1.msra.mxu0 0.0
    %719 = vmatprep.subr.mxu0 0.0
    %720 = vmatpush1.msra.mxu0 0.0
    %721 = vmatprep.subr.mxu0 0.0
    %722 = vmatpush1.msra.mxu0 0.0
    %723 = vmatprep.subr.mxu0 0.0
    %724 = vmatpush1.msra.mxu0 0.0
    %725 = vmatprep.subr.mxu0 0.0
    %726 = vmatpush1.msra.mxu0 0.0
    %727 = vmatprep.subr.mxu0 0.0
    %728 = vmatpush1.msra.mxu0 0.0
    %729 = vmatprep.subr.mxu0 0.0
    %730 = vmatpush1.msra.mxu0 0.0
    %731 = vmatprep.subr.mxu0 0.0
    %732 = vmatpush1.msra.mxu0 0.0
    %733 = vmatprep.subr.mxu0 0.0
    %734 = vmatpush1.msra.mxu0 0.0
    %735 = vmatprep.subr.mxu0 0.0
    %736 = vmatpush1.msra.mxu0 0.0
    %737 = vmatprep.subr.mxu0 0.0
    %738 = vmatpush1.msra.mxu0 0.0
    %739 = vmatprep.subr.mxu0 0.0
    %740 = vmatpush1.msra.mxu0 0.0
    %741 = vmatprep.subr.mxu0 0.0
    %742 = vmatpush1.msra.mxu0 0.0
    %743 = vmatprep.subr.mxu0 0.0
    %744 = vmatpush1.msra.mxu0 0.0
    %745 = vmatprep.subr.mxu0 0.0
    %746 = vmatpush1.msra.mxu0 0.0
    %747 = vmatprep.subr.mxu0 0.0
    %748 = vmatpush1.msra.mxu0 0.0
    %749 = vmatprep.subr.mxu0 0.0
    %750 = vmatpush1.msra.mxu0 0.0
    %751 = vmatprep.subr.mxu0 0.0
    %752 = vmatpush1.msra.mxu0 0.0
    %753 = vmatprep.subr.mxu0 0.0
    %754 = vmatpush1.msra.mxu0 0.0
    %755 = vmatprep.subr.mxu0 0.0
    %756 = vmatpush1.msra.mxu0 0.0
    %757 = vmatprep.subr.mxu0 0.0
    %758 = vmatpush1.msra.mxu0 0.0
    %759 = vmatprep.subr.mxu0 0.0
    %760 = vmatpush1.msra.mxu0 0.0
    %761 = vmatprep.subr.mxu0 0.0
    %762 = vmatpush1.msra.mxu0 0.0
    %763 = vmatprep.subr.mxu0 0.0
    %764 = vmatpush1.msra.mxu0 0.0
    %765 = vmatprep.subr.mxu0 0.0
    %766 = vmatpush1.msra.mxu0 0.0
    %767 = vmatprep.subr.mxu0 0.0
    %768 = vmatpush1.msra.mxu0 0.0
    %769 = vmatprep.mubr.f32.mxu0 0.0
    %770 = vmatmul.mubr.f32.gmra.mrb[0].mxu0 %v315
    %v771 = vpop.f32.mrb[0].mxu0
    %v772 = vadd.f32 0.0, %v771
    %v773 = vpop.f32.mrb[0].mxu0
    %774 = vmatprep.mubr.f32.mxu0 0.0
    %775 = vmatmul.mubr.f32.gmra.mrb[0].mxu0 %v318
    %v776 = vpop.f32.mrb[0].mxu0
    %v777 = vadd.f32 0.0, %v776
    %v778 = vpop.f32.mrb[0].mxu0
    %779 = vdwg.mxu0
    %780 = vmatprep.subr.mxu0 0.0
    %781 = vmatpush1.msra.mxu0 %v162
    %782 = vmatprep.subr.mxu0 0.0
    %783 = vmatpush1.msra.mxu0 %v163
    %784 = vmatprep.subr.mxu0 0.0
    %785 = vmatpush1.msra.mxu0 %v164
    %786 = vmatprep.subr.mxu0 0.0
    %787 = vmatpush1.msra.mxu0 %v165
    %788 = vmatprep.subr.mxu0 0.0
    %789 = vmatpush1.msra.mxu0 %v166
    %790 = vmatprep.subr.mxu0 0.0
    %791 = vmatpush1.msra.mxu0 %v167
    %792 = vmatprep.subr.mxu0 0.0
    %793 = vmatpush1.msra.mxu0 %v168
    %794 = vmatprep.subr.mxu0 0.0
    %795 = vmatpush1.msra.mxu0 %v169
    %796 = vmatprep.subr.mxu0 0.0
    %797 = vmatpush1.msra.mxu0 %v170
    %798 = vmatprep.subr.mxu0 0.0
    %799 = vmatpush1.msra.mxu0 %v171
    %800 = vmatprep.subr.mxu0 0.0
    %801 = vmatpush1.msra.mxu0 %v172
    %802 = vmatprep.subr.mxu0 0.0
    %803 = vmatpush1.msra.mxu0 %v173
    %804 = vmatprep.subr.mxu0 0.0
    %805 = vmatpush1.msra.mxu0 %v174
    %806 = vmatprep.subr.mxu0 0.0
    %807 = vmatpush1.msra.mxu0 %v175
    %808 = vmatprep.subr.mxu0 0.0
    %809 = vmatpush1.msra.mxu0 %v176
    %810 = vmatprep.subr.mxu0 0.0
    %811 = vmatpush1.msra.mxu0 %v177
    %812 = vmatprep.subr.mxu0 0.0
    %813 = vmatpush1.msra.mxu0 0.0
    %814 = vmatprep.subr.mxu0 0.0
    %815 = vmatpush1.msra.mxu0 0.0
    %816 = vmatprep.subr.mxu0 0.0
    %817 = vmatpush1.msra.mxu0 0.0
    %818 = vmatprep.subr.mxu0 0.0
    %819 = vmatpush1.msra.mxu0 0.0
    %820 = vmatprep.subr.mxu0 0.0
    %821 = vmatpush1.msra.mxu0 0.0
    %822 = vmatprep.subr.mxu0 0.0
    %823 = vmatpush1.msra.mxu0 0.0
    %824 = vmatprep.subr.mxu0 0.0
    %825 = vmatpush1.msra.mxu0 0.0
    %826 = vmatprep.subr.mxu0 0.0
    %827 = vmatpush1.msra.mxu0 0.0
    %828 = vmatprep.subr.mxu0 0.0
    %829 = vmatpush1.msra.mxu0 0.0
    %830 = vmatprep.subr.mxu0 0.0
    %831 = vmatpush1.msra.mxu0 0.0
    %832 = vmatprep.subr.mxu0 0.0
    %833 = vmatpush1.msra.mxu0 0.0
    %834 = vmatprep.subr.mxu0 0.0
    %835 = vmatpush1.msra.mxu0 0.0
    %836 = vmatprep.subr.mxu0 0.0
    %837 = vmatpush1.msra.mxu0 0.0
    %838 = vmatprep.subr.mxu0 0.0
    %839 = vmatpush1.msra.mxu0 0.0
    %840 = vmatprep.subr.mxu0 0.0
    %841 = vmatpush1.msra.mxu0 0.0
    %842 = vmatprep.subr.mxu0 0.0
    %843 = vmatpush1.msra.mxu0 0.0
    %844 = vmatprep.mubr.f32.mxu0 0.0
    %845 = vmatmul.mubr.f32.gmra.mrb[0].mxu0 %v697
    %v846 = vpop.f32.mrb[0].mxu0
    %v847 = vadd.f32 0.0, %v846
    %v848 = vpop.f32.mrb[0].mxu0
    %849 = vmatprep.mubr.f32.mxu0 0.0
    %850 = vmatmul.mubr.f32.gmra.mrb[0].mxu0 %v702
    %v851 = vpop.f32.mrb[0].mxu0
    %v852 = vadd.f32 0.0, %v851
    %v853 = vpop.f32.mrb[0].mxu0
    %854 = vdwg.mxu0
    %855 = vmatprep.subr.mxu0 0.0
    %856 = vmatpush1.msra.mxu0 %v178
    %857 = vmatprep.subr.mxu0 0.0
    %858 = vmatpush1.msra.mxu0 %v179
    %859 = vmatprep.subr.mxu0 0.0
    %860 = vmatpush1.msra.mxu0 %v180
    %861 = vmatprep.subr.mxu0 0.0
    %862 = vmatpush1.msra.mxu0 %v181
    %863 = vmatprep.subr.mxu0 0.0
    %864 = vmatpush1.msra.mxu0 %v182
    %865 = vmatprep.subr.mxu0 0.0
    %866 = vmatpush1.msra.mxu0 %v183
    %867 = vmatprep.subr.mxu0 0.0
    %868 = vmatpush1.msra.mxu0 %v184
    %869 = vmatprep.subr.mxu0 0.0
    %870 = vmatpush1.msra.mxu0 %v185
    %871 = vmatprep.subr.mxu0 0.0
    %872 = vmatpush1.msra.mxu0 %v186
    %873 = vmatprep.subr.mxu0 0.0
    %874 = vmatpush1.msra.mxu0 %v187
    %875 = vmatprep.subr.mxu0 0.0
    %876 = vmatpush1.msra.mxu0 %v188
    %877 = vmatprep.subr.mxu0 0.0
    %878 = vmatpush1.msra.mxu0 %v189
    %879 = vmatprep.subr.mxu0 0.0
    %880 = vmatpush1.msra.mxu0 %v190
    %881 = vmatprep.subr.mxu0 0.0
    %882 = vmatpush1.msra.mxu0 %v191
    %883 = vmatprep.subr.mxu0 0.0
    %884 = vmatpush1.msra.mxu0 %v192
    %885 = vmatprep.subr.mxu0 0.0
    %886 = vmatpush1.msra.mxu0 %v193
    %887 = vmatprep.subr.mxu0 0.0
    %888 = vmatpush1.msra.mxu0 0.0
    %889 = vmatprep.subr.mxu0 0.0
    %890 = vmatpush1.msra.mxu0 0.0
    %891 = vmatprep.subr.mxu0 0.0
    %892 = vmatpush1.msra.mxu0 0.0
    %893 = vmatprep.subr.mxu0 0.0
    %894 = vmatpush1.msra.mxu0 0.0
    %895 = vmatprep.subr.mxu0 0.0
    %896 = vmatpush1.msra.mxu0 0.0
    %897 = vmatprep.subr.mxu0 0.0
    %898 = vmatpush1.msra.mxu0 0.0
    %899 = vmatprep.subr.mxu0 0.0
    %900 = vmatpush1.msra.mxu0 0.0
    %901 = vmatprep.subr.mxu0 0.0
    %902 = vmatpush1.msra.mxu0 0.0
    %903 = vmatprep.subr.mxu0 0.0
    %904 = vmatpush1.msra.mxu0 0.0
    %905 = vmatprep.subr.mxu0 0.0
    %906 = vmatpush1.msra.mxu0 0.0
    %907 = vmatprep.subr.mxu0 0.0
    %908 = vmatpush1.msra.mxu0 0.0
    %909 = vmatprep.subr.mxu0 0.0
    %910 = vmatpush1.msra.mxu0 0.0
    %911 = vmatprep.subr.mxu0 0.0
    %912 = vmatpush1.msra.mxu0 0.0
    %913 = vmatprep.subr.mxu0 0.0
    %914 = vmatpush1.msra.mxu0 0.0
    %915 = vmatprep.subr.mxu0 0.0
    %916 = vmatpush1.msra.mxu0 0.0
    %917 = vmatprep.subr.mxu0 0.0
    %918 = vmatpush1.msra.mxu0 0.0
    %919 = vmatprep.mubr.f32.mxu0 0.0
    %920 = vmatmul.mubr.f32.gmra.mrb[0].mxu0 %v772
    %v921 = vpop.f32.mrb[0].mxu0
    %v922 = vadd.f32 0.0, %v921
    %v923 = vpop.f32.mrb[0].mxu0
    %924 = vmatprep.mubr.f32.mxu0 0.0
    %925 = vmatmul.mubr.f32.gmra.mrb[0].mxu0 %v777
    %v926 = vpop.f32.mrb[0].mxu0
    %v927 = vadd.f32 0.0, %v926
    %v928 = vpop.f32.mrb[0].mxu0
    %929 = vdwg.mxu0
    %v930 = vadd.f32 %v697, %v772
    %v931 = vadd.f32 %v702, %v777
    %932 = vmatprep.subr.mxu0 0.0
    %933 = vmatpush1.msra.mxu0 %v194
    %934 = vmatprep.subr.mxu0 0.0
    %935 = vmatpush1.msra.mxu0 %v195
    %936 = vmatprep.subr.mxu0 0.0
    %937 = vmatpush1.msra.mxu0 %v196
    %938 = vmatprep.subr.mxu0 0.0
    %939 = vmatpush1.msra.mxu0 %v197
    %940 = vmatprep.subr.mxu0 0.0
    %941 = vmatpush1.msra.mxu0 %v198
    %942 = vmatprep.subr.mxu0 0.0
    %943 = vmatpush1.msra.mxu0 %v199
    %944 = vmatprep.subr.mxu0 0.0
    %945 = vmatpush1.msra.mxu0 %v200
    %946 = vmatprep.subr.mxu0 0.0
    %947 = vmatpush1.msra.mxu0 %v201
    %948 = vmatprep.subr.mxu0 0.0
    %949 = vmatpush1.msra.mxu0 %v202
    %950 = vmatprep.subr.mxu0 0.0
    %951 = vmatpush1.msra.mxu0 %v203
    %952 = vmatprep.subr.mxu0 0.0
    %953 = vmatpush1.msra.mxu0 %v204
    %954 = vmatprep.subr.mxu0 0.0
    %955 = vmatpush1.msra.mxu0 %v205
    %956 = vmatprep.subr.mxu0 0.0
    %957 = vmatpush1.msra.mxu0 %v206
    %958 = vmatprep.subr.mxu0 0.0
    %959 = vmatpush1.msra.mxu0 %v207
    %960 = vmatprep.subr.mxu0 0.0
    %961 = vmatpush1.msra.mxu0 %v208
    %962 = vmatprep.subr.mxu0 0.0
    %963 = vmatpush1.msra.mxu0 %v209
    %964 = vmatprep.subr.mxu0 0.0
    %965 = vmatpush1.msra.mxu0 0.0
    %966 = vmatprep.subr.mxu0 0.0
    %967 = vmatpush1.msra.mxu0 0.0
    %968 = vmatprep.subr.mxu0 0.0
    %969 = vmatpush1.msra.mxu0 0.0
    %970 = vmatprep.subr.mxu0 0.0
    %971 = vmatpush1.msra.mxu0 0.0
    %972 = vmatprep.subr.mxu0 0.0
    %973 = vmatpush1.msra.mxu0 0.0
    %974 = vmatprep.subr.mxu0 0.0
    %975 = vmatpush1.msra.mxu0 0.0
    %976 = vmatprep.subr.mxu0 0.0
    %977 = vmatpush1.msra.mxu0 0.0
    %978 = vmatprep.subr.mxu0 0.0
    %979 = vmatpush1.msra.mxu0 0.0
    %980 = vmatprep.subr.mxu0 0.0
    %981 = vmatpush1.msra.mxu0 0.0
    %982 = vmatprep.subr.mxu0 0.0
    %983 = vmatpush1.msra.mxu0 0.0
    %984 = vmatprep.subr.mxu0 0.0
    %985 = vmatpush1.msra.mxu0 0.0
    %986 = vmatprep.subr.mxu0 0.0
    %987 = vmatpush1.msra.mxu0 0.0
    %988 = vmatprep.subr.mxu0 0.0
    %989 = vmatpush1.msra.mxu0 0.0
    %990 = vmatprep.subr.mxu0 0.0
    %991 = vmatpush1.msra.mxu0 0.0
    %992 = vmatprep.subr.mxu0 0.0
    %993 = vmatpush1.msra.mxu0 0.0
    %994 = vmatprep.subr.mxu0 0.0
    %995 = vmatpush1.msra.mxu0 0.0
    %996 = vmatprep.mubr.f32.mxu0 0.0
    %997 = vmatmul.mubr.f32.gmra.mrb[0].mxu0 %v930
    %v998 = vpop.f32.mrb[0].mxu0
    %v999 = vadd.f32 0.0, %v998
    %v1000 = vpop.f32.mrb[0].mxu0
    %1001 = vmatprep.mubr.f32.mxu0 0.0
    %1002 = vmatmul.mubr.f32.gmra.mrb[0].mxu0 %v931
    %v1003 = vpop.f32.mrb[0].mxu0
    %v1004 = vadd.f32 0.0, %v1003
    %v1005 = vpop.f32.mrb[0].mxu0
    %1006 = vdwg.mxu0
    %v1007 = vsub.f32 %v847, %v922
    %v1008 = vsub.f32 %v852, %v927
    %v1009 = vsub.f32 %v999, %v847
    %v1010 = vsub.f32 %v1004, %v852
    %v1011 = vsub.f32 %v1009, %v922
    %v1012 = vsub.f32 %v1010, %v927
    %v1013 = vmul.f32 %v622, %v622
    %v1014 = vmul.f32 %v623, %v623
    %v1015 = vmul.f32 %v626, %v626
    %v1016 = vmul.f32 %v627, %v627
    %v1017 = vadd.f32 %v1013, %v1015
    %v1018 = vadd.f32 %v1014, %v1016
    %v1019 = vmul.f32 %v1007, %v1007
    %v1020 = vmul.f32 %v1008, %v1008
    %v1021 = vmul.f32 %v1011, %v1011
    %v1022 = vmul.f32 %v1012, %v1012
    %v1023 = vadd.f32 %v1019, %v1021
    %v1024 = vadd.f32 %v1020, %v1022
    %v1025 = vrsqrt.pop %v1017
    %v1026 = vmul.f32 %v1017, %v1025
    %vm1027 = vcmp.eq.f32.partialorder %v1017, inf
    %v1028 = vsel %vm1027, %v1017, %v1026
    %vm1029 = vcmp.eq.f32.partialorder %v1017, 0.0
    %v1030 = vand.u32 %v1017, 2147483648
    %v1031 = vsel %vm1029, %v1030, %v1028
    %v1032 = vrsqrt.pop %v1018
    %v1033 = vmul.f32 %v1018, %v1032
    %vm1034 = vcmp.eq.f32.partialorder %v1018, inf
    %v1035 = vsel %vm1034, %v1018, %v1033
    %vm1036 = vcmp.eq.f32.partialorder %v1018, 0.0
    %v1037 = vand.u32 %v1018, 2147483648
    %v1038 = vsel %vm1036, %v1037, %v1035
    %v1039 = vrsqrt.pop %v1023
    %v1040 = vmul.f32 %v1023, %v1039
    %vm1041 = vcmp.eq.f32.partialorder %v1023, inf
    %v1042 = vsel %vm1041, %v1023, %v1040
    %vm1043 = vcmp.eq.f32.partialorder %v1023, 0.0
    %v1044 = vand.u32 %v1023, 2147483648
    %v1045 = vsel %vm1043, %v1044, %v1042
    %v1046 = vrsqrt.pop %v1024
    %v1047 = vmul.f32 %v1024, %v1046
    %vm1048 = vcmp.eq.f32.partialorder %v1024, inf
    %v1049 = vsel %vm1048, %v1024, %v1047
    %vm1050 = vcmp.eq.f32.partialorder %v1024, 0.0
    %v1051 = vand.u32 %v1024, 2147483648
    %v1052 = vsel %vm1050, %v1051, %v1049
    %v1053 = vsub.f32 %v1031, %v1045
    %v1054 = vsub.f32 %v1038, %v1052
    %v1055 = vand.u32 2147483647, %v1053
    %v1056 = vand.u32 2147483647, %v1054
    %v1057 = vmul.f32 %v210, %v1055
    %v1058 = vmul.f32 %v211, %v1056
    %v1059 = vadd.f32 %v1057, %v1058
    %1060 = vadd.xlane.f32.xlu0 %v1059
    %v1061 = vpop.xlane.xlu0 %1060
    %v1062 = vrot.slane %v1061, 4
    %v1063 = vadd.f32 %v1061, %v1062
    %v1064 = vrot.slane %v1063, 2
    %v1065 = vadd.f32 %v1063, %v1064
    %v1066 = vrot.slane %v1065, 1
    %v1067 = vadd.f32 %v1065, %v1066
    %s1068 = vtos %v1067
    %v1069 = vmul.f32 %v212, %v1055
    %v1070 = vmul.f32 %v213, %v1056
    %v1071 = vadd.f32 %v1069, %v1070
    %1072 = vadd.xlane.f32.xlu0 %v1071
    %v1073 = vpop.xlane.xlu0 %1072
    %v1074 = vrot.slane %v1073, 4
    %v1075 = vadd.f32 %v1073, %v1074
    %v1076 = vrot.slane %v1075, 2
    %v1077 = vadd.f32 %v1075, %v1076
    %v1078 = vrot.slane %v1077, 1
    %v1079 = vadd.f32 %v1077, %v1078
    %s1080 = vtos %v1079
    %v1081 = vmul.f32 %v626, %v1007
    %v1082 = vmul.f32 %v627, %v1008
    %v1083 = vmul.f32 %v622, %v1011
    %v1084 = vmul.f32 %v623, %v1012
    %v1085 = vsub.f32 %v1081, %v1083
    %v1086 = vsub.f32 %v1082, %v1084
    %v1087 = vmul.f32 %v622, %v1007
    %v1088 = vmul.f32 %v623, %v1008
    %v1089 = vmul.f32 %v626, %v1011
    %v1090 = vmul.f32 %v627, %v1012
    %v1091 = vadd.f32 %v1087, %v1089
    %v1092 = vadd.f32 %v1088, %v1090
    %v1093 = vand.u32 2147483647, %v1085
    %v1094 = vand.u32 2147483647, %v1086
    %v1095 = vand.u32 2147483647, %v1091
    %v1096 = vand.u32 2147483647, %v1092
    %vm1097 = vcmp.gt.f32.partialorder %v1095, 0.0
    %vm1098 = vcmp.gt.f32.partialorder %v1096, 0.0
    %v1099 = vsel %vm1097, %v1095, 1.0
    %v1100 = vsel %vm1098, %v1096, 1.0
    %v1101 = vrcp.pop %v1099
    %v1102 = vrcp.pop %v1100
    %v1103 = vmul.f32 %v1093, %v1101
    %v1104 = vmul.f32 %v1094, %v1102
    %vm1105 = vcmp.gt.f32.partialorder %v1103, 2.4142137
    %vm1106 = vcmp.gt.f32.partialorder %v1104, 2.4142137
    %vm1107 = vcmp.gt.f32.partialorder %v1103, 0.41421357
    %vm1108 = vcmp.gt.f32.partialorder %v1104, 0.41421357
    %v1109 = vsel %vm1105, %v1103, 1.0
    %v1110 = vsel %vm1106, %v1104, 1.0
    %v1111 = vrcp.pop %v1109
    %v1112 = vrcp.pop %v1110
    %v1113 = vsub.f32 0.0, %v1111
    %v1114 = vsub.f32 0.0, %v1112
    %v1115 = vsub.f32 %v1103, 1.0
    %v1116 = vsub.f32 %v1104, 1.0
    %v1117 = vadd.f32 %v1103, 1.0
    %v1118 = vadd.f32 %v1104, 1.0
    %v1119 = vrcp.pop %v1117
    %v1120 = vrcp.pop %v1118
    %v1121 = vmul.f32 %v1115, %v1119
    %v1122 = vmul.f32 %v1116, %v1120
    %v1123 = vsel %vm1107, %v1121, %v1103
    %v1124 = vsel %vm1108, %v1122, %v1104
    %v1125 = vsel %vm1105, %v1113, %v1123
    %v1126 = vsel %vm1106, %v1114, %v1124
    %v1127 = vsel %vm1107, 0.7853982, 0.0
    %v1128 = vsel %vm1108, 0.7853982, 0.0
    %v1129 = vsel %vm1105, 1.5707964, %v1127
    %v1130 = vsel %vm1106, 1.5707964, %v1128
    %v1131 = vmul.f32 %v1125, %v1125
    %v1132 = vmul.f32 %v1126, %v1126
    %v1133 = vmul.f32 %v1131, 0.080537446
    %v1134 = vmul.f32 %v1132, 0.080537446
    %v1135 = vsub.f32 %v1133, 0.13877685
    %v1136 = vsub.f32 %v1134, 0.13877685
    %v1137 = vmul.f32 %v1135, %v1131
    %v1138 = vmul.f32 %v1136, %v1132
    %v1139 = vadd.f32 %v1137, 0.19977711
    %v1140 = vadd.f32 %v1138, 0.19977711
    %v1141 = vmul.f32 %v1139, %v1131
    %v1142 = vmul.f32 %v1140, %v1132
    %v1143 = vsub.f32 %v1141, 0.3333295
    %v1144 = vsub.f32 %v1142, 0.3333295
    %v1145 = vadd.f32 %v1129, %v1125
    %v1146 = vadd.f32 %v1130, %v1126
    %v1147 = vmul.f32 %v1125, %v1131
    %v1148 = vmul.f32 %v1126, %v1132
    %v1149 = vmul.f32 %v1147, %v1143
    %v1150 = vmul.f32 %v1148, %v1144
    %v1151 = vadd.f32 %v1145, %v1149
    %v1152 = vadd.f32 %v1146, %v1150
    %vm1153 = vcmp.gt.f32.partialorder %v1091, 0.0
    %vm1154 = vcmp.gt.f32.partialorder %v1092, 0.0
    %vm1155 = vcmp.lt.f32.partialorder %v1091, 0.0
    %vm1156 = vcmp.lt.f32.partialorder %v1092, 0.0
    %v1157 = vsub.f32 3.1415927, %v1151
    %v1158 = vsub.f32 3.1415927, %v1152
    %vm1159 = vcmp.gt.f32.partialorder %v1093, 0.0
    %vm1160 = vcmp.gt.f32.partialorder %v1094, 0.0
    %v1161 = vsel %vm1159, 1.5707964, 0.0
    %v1162 = vsel %vm1160, 1.5707964, 0.0
    %v1163 = vsel %vm1155, %v1157, %v1161
    %v1164 = vsel %vm1156, %v1158, %v1162
    %v1165 = vsel %vm1153, %v1151, %v1163
    %v1166 = vsel %vm1154, %v1152, %v1164
    %v1167 = vmul.f32 %v210, %v1165
    %v1168 = vmul.f32 %v211, %v1166
    %v1169 = vadd.f32 %v1167, %v1168
    %1170 = vadd.xlane.f32.xlu0 %v1169
    %v1171 = vpop.xlane.xlu0 %1170
    %v1172 = vrot.slane %v1171, 4
    %v1173 = vadd.f32 %v1171, %v1172
    %v1174 = vrot.slane %v1173, 2
    %v1175 = vadd.f32 %v1173, %v1174
    %v1176 = vrot.slane %v1175, 1
    %v1177 = vadd.f32 %v1175, %v1176
    %s1178 = vtos %v1177
    %v1179 = vsub.f32 %v1017, %v1023
    %v1180 = vsub.f32 %v1018, %v1024
    %1181 = vmatprep.subr.mxu0 0.0
    %1182 = vmatpush1.msra.mxu0 %v214
    %1183 = vmatprep.subr.mxu0 0.0
    %1184 = vmatpush1.msra.mxu0 %v215
    %1185 = vmatprep.subr.mxu0 0.0
    %1186 = vmatpush1.msra.mxu0 %v216
    %1187 = vmatprep.subr.mxu0 0.0
    %1188 = vmatpush1.msra.mxu0 %v217
    %1189 = vmatprep.subr.mxu0 0.0
    %1190 = vmatpush1.msra.mxu0 %v218
    %1191 = vmatprep.subr.mxu0 0.0
    %1192 = vmatpush1.msra.mxu0 %v219
    %1193 = vmatprep.subr.mxu0 0.0
    %1194 = vmatpush1.msra.mxu0 %v220
    %1195 = vmatprep.subr.mxu0 0.0
    %1196 = vmatpush1.msra.mxu0 %v221
    %1197 = vmatprep.subr.mxu0 0.0
    %1198 = vmatpush1.msra.mxu0 %v222
    %1199 = vmatprep.subr.mxu0 0.0
    %1200 = vmatpush1.msra.mxu0 %v223
    %1201 = vmatprep.subr.mxu0 0.0
    %1202 = vmatpush1.msra.mxu0 %v224
    %1203 = vmatprep.subr.mxu0 0.0
    %1204 = vmatpush1.msra.mxu0 %v225
    %1205 = vmatprep.subr.mxu0 0.0
    %1206 = vmatpush1.msra.mxu0 %v226
    %1207 = vmatprep.subr.mxu0 0.0
    %1208 = vmatpush1.msra.mxu0 %v227
    %1209 = vmatprep.subr.mxu0 0.0
    %1210 = vmatpush1.msra.mxu0 %v228
    %1211 = vmatprep.subr.mxu0 0.0
    %1212 = vmatpush1.msra.mxu0 %v229
    %1213 = vmatprep.subr.mxu0 0.0
    %1214 = vmatpush1.msra.mxu0 0.0
    %1215 = vmatprep.subr.mxu0 0.0
    %1216 = vmatpush1.msra.mxu0 0.0
    %1217 = vmatprep.subr.mxu0 0.0
    %1218 = vmatpush1.msra.mxu0 0.0
    %1219 = vmatprep.subr.mxu0 0.0
    %1220 = vmatpush1.msra.mxu0 0.0
    %1221 = vmatprep.subr.mxu0 0.0
    %1222 = vmatpush1.msra.mxu0 0.0
    %1223 = vmatprep.subr.mxu0 0.0
    %1224 = vmatpush1.msra.mxu0 0.0
    %1225 = vmatprep.subr.mxu0 0.0
    %1226 = vmatpush1.msra.mxu0 0.0
    %1227 = vmatprep.subr.mxu0 0.0
    %1228 = vmatpush1.msra.mxu0 0.0
    %1229 = vmatprep.subr.mxu0 0.0
    %1230 = vmatpush1.msra.mxu0 0.0
    %1231 = vmatprep.subr.mxu0 0.0
    %1232 = vmatpush1.msra.mxu0 0.0
    %1233 = vmatprep.subr.mxu0 0.0
    %1234 = vmatpush1.msra.mxu0 0.0
    %1235 = vmatprep.subr.mxu0 0.0
    %1236 = vmatpush1.msra.mxu0 0.0
    %1237 = vmatprep.subr.mxu0 0.0
    %1238 = vmatpush1.msra.mxu0 0.0
    %1239 = vmatprep.subr.mxu0 0.0
    %1240 = vmatpush1.msra.mxu0 0.0
    %1241 = vmatprep.subr.mxu0 0.0
    %1242 = vmatpush1.msra.mxu0 0.0
    %1243 = vmatprep.subr.mxu0 0.0
    %1244 = vmatpush1.msra.mxu0 0.0
    %1245 = vmatprep.mubr.f32.mxu0 0.0
    %1246 = vmatmul.mubr.f32.gmra.mrb[0].mxu0 %v1179
    %v1247 = vpop.f32.mrb[0].mxu0
    %v1248 = vadd.f32 0.0, %v1247
    %v1249 = vpop.f32.mrb[0].mxu0
    %1250 = vmatprep.mubr.f32.mxu0 0.0
    %1251 = vmatmul.mubr.f32.gmra.mrb[0].mxu0 %v1180
    %v1252 = vpop.f32.mrb[0].mxu0
    %v1253 = vadd.f32 0.0, %v1252
    %v1254 = vpop.f32.mrb[0].mxu0
    %1255 = vdwg.mxu0
    %v1256 = vadd.f32 %v1248, %v1253
    %v1257 = vrot.slane %v1256, 4
    %v1258 = vadd.f32 %v1256, %v1257
    %v1259 = vrot.slane %v1258, 2
    %v1260 = vadd.f32 %v1258, %v1259
    %v1261 = vrot.slane %v1260, 1
    %v1262 = vadd.f32 %v1260, %v1261
    %v1263 = vand.u32 2147483647, %v1262
    %vm1264 = vcmask 1040384
    %v1265 = vsel %vm1264, %v1263, 0.0
    %1266 = vadd.xlane.f32.xlu0 %v1265
    %v1267 = vpop.xlane.xlu0 %1266
    %v1268 = vrot.slane %v1267, 4
    %v1269 = vadd.f32 %v1267, %v1268
    %v1270 = vrot.slane %v1269, 2
    %v1271 = vadd.f32 %v1269, %v1270
    %v1272 = vrot.slane %v1271, 1
    %v1273 = vadd.f32 %v1271, %v1272
    %s1274 = vtos %v1273
    %s1275 = smul.f32 %s1274, 0.00390625
    %v1276 = vlaneseq
    %v1277 = vshrl.u32 %v1276, 7
    %v1278 = vlaneseq
    %v1279 = vand.u32 %v1278, 127
    %vm1280 = vcmp.eq.s32.totalorder %v1277, 0
    %vm1281 = vcmp.eq.s32.totalorder %v1279, 0
    %vm1282 = vmand %vm1280, %vm1281
    %vm1283 = vcmp.eq.s32.totalorder %v1279, 1
    %vm1284 = vmand %vm1280, %vm1283
    %vm1285 = vcmp.eq.s32.totalorder %v1279, 2
    %vm1286 = vmand %vm1280, %vm1285
    %vm1287 = vcmp.eq.s32.totalorder %v1279, 3
    %vm1288 = vmand %vm1280, %vm1287
    %v1289 = vstv %s1275
    %v1290 = vsel %vm1288, %v1289, 0.0
    %v1291 = vstv %s1080
    %v1292 = vsel %vm1286, %v1291, %v1290
    %v1293 = vstv %s1178
    %v1294 = vsel %vm1284, %v1293, %v1292
    %v1295 = vstv %s1068
    %v1296 = vsel %vm1282, %v1295, %v1294
    %1297 = vst [vmem:[#allocation17] sm:$0xff] %v1296
    // Predicated region
    $region78: #{tpu_custom_call.1} parent=1 // pred_check
      _
    $region79: #{tpu_custom_call.1} parent=1 // pred_check_branch
      %1299 = sbr.rel (0) target = $region81
    $region80: #{tpu_custom_call.1} parent=1 // pred_region
      %s1301 = ssub.s32 128, 128
      %1302 = vsyncadd [#allocation4], %s1301
      %s1304 = sshll.u32 [#allocation17], 4
      %s1305 = int_to_ptr.vmem [resolvable:$true] %s1304
      %1307 = dma.vmem_to_hbm [thread:$0]  %s1305, 128, %s10, [#allocation4]
    $region81: #{tpu_custom_call.1} parent=1 // pred_fallthru
      _
    // Predicated region
    $region82: #{tpu_custom_call.1} parent=1 // pred_check
      _
    $region83: #{tpu_custom_call.1} parent=1 // pred_check_branch
      %1309 = sbr.rel (0) target = $region85
    $region84: #{tpu_custom_call.1} parent=1 // pred_region
      %1310 = dma.done [#allocation4], 128
    $region85: #{tpu_custom_call.1} parent=1 // pred_fallthru
      _
    %1311 = vsyncpa [#allocation3], 1
    %1312 = vsyncpa [#allocation6], 1
    %1313 = vsyncpa [#allocation9], 1
    %1314 = vsyncpa [#allocation12], 1
    %1315 = vsyncpa [#allocation15], 1
    %1316 = vsyncpa [#allocation4], 1

</llo_original>
